<compile_context>
chip_gen: v6e
topology: v6e:2x2x1
jax: 0.10.0
libtpu: 0.0.40
codegen_flags: <defaults>
</compile_context>

<pallas_src>
import functools
import numpy as np
import jax
import jax.numpy as jnp
from jax.experimental import pallas as pl
from jax.experimental.pallas import tpu as pltpu


# ---------------------------------------------------------------------------
# In-kernel arctan (Cephes atanf minimax polynomial). VPU ops + one divide per
# call (branch numerator/denominator merged with selects), ~1 ulp in float32.
# Matches torch.arctan to fp32 tolerance.
# ---------------------------------------------------------------------------
def _atan(x):
    t3 = np.float32(0.4142135623730950)   # tan(pi/8)
    t8 = np.float32(2.414213562373095)    # tan(3*pi/8)
    one = np.float32(1.0)
    sgn = jnp.where(x < 0.0, np.float32(-1.0), one)
    ax = jnp.abs(x)
    big = ax > t8
    mid = jnp.logical_and(ax > t3, jnp.logical_not(big))
    num = jnp.where(big, -one, jnp.where(mid, ax - one, ax))
    den = jnp.where(big, ax, jnp.where(mid, ax + one, one))
    xr = num / den
    yoff = jnp.where(big, np.float32(np.pi / 2),
                     jnp.where(mid, np.float32(np.pi / 4), np.float32(0.0)))
    z = xr * xr
    poly = ((((np.float32(8.05374449538e-2) * z - np.float32(1.38776856032e-1)) * z
              + np.float32(1.99777106478e-1)) * z
             - np.float32(3.33329491539e-1)) * z) * xr + xr
    return sgn * (yoff + poly)


# ---------------------------------------------------------------------------
# Kernel: the whole batch in one invocation; everything fused.
#   t_ref : (B, P)       planet times
#   w_ref : (P, 5P)      [W_phi1 | W_th1 | W_r1 | W_th2 | W_manda]  (in, out)
#   v_ref : (1, 7P)      [b_phi1|b_th1|b_r1|b_th2|b_manda|r2*sin(phi2)|r2*cos(phi2)]
#   out   : (B, 2P)      lanes [0,P) = az (lat deg), lanes [P,2P) = alt (lon deg)
# ---------------------------------------------------------------------------
def _lata_kernel(P, view_x, view_y, view_z, a_c, b_c, e_sq, e2_sq, rad2deg,
                 t_ref, w_ref, v_ref, out_ref):
    t = t_ref[...]
    w = w_ref[...]
    v = v_ref[...]

    # Four independent Linears (phi1|theta1|radius1|theta2) fused into one
    # unrolled VPU broadcast-MAC over K=P (exact fp32; far too small for MXU).
    y4 = v[:, 0:4 * P]
    for k in range(P):
        y4 = y4 + t[:, k:k + 1] * w[k:k + 1, 0:4 * P]

    # Two wide transcendentals over the packed slab instead of six narrow ones.
    s4 = jnp.sin(y4)
    c4 = jnp.cos(y4)

    sin_phi1 = s4[:, 0 * P:1 * P]
    cos_phi1 = c4[:, 0 * P:1 * P]
    sin_th1 = s4[:, 1 * P:2 * P]
    cos_th1 = c4[:, 1 * P:2 * P]
    r1 = y4[:, 2 * P:3 * P]
    sin_th2 = s4[:, 3 * P:4 * P]
    cos_th2 = c4[:, 3 * P:4 * P]

    mean_x = sin_phi1 * sin_th1 * r1
    mean_y = sin_phi1 * cos_th1 * r1
    mean_z = cos_phi1 * r1

    # Dependent Linear (manda) — second unrolled MAC.
    manda_z = v[:, 4 * P:5 * P]
    for k in range(P):
        manda_z = manda_z + mean_z[:, k:k + 1] * w[k:k + 1, 4 * P:5 * P]

    # Batch-invariant phi2 / radius2 terms precomputed host-side.
    r2_sin_phi2 = v[:, 5 * P:6 * P]
    r2_cos_phi2 = v[:, 6 * P:7 * P]

    sx = r2_sin_phi2 * cos_th2 + mean_x
    sy = r2_sin_phi2 * sin_th2 + mean_y
    sz = r2_cos_phi2 + manda_z

    # convert_coordinates: subtract observer ECEF position (compile-time consts).
    x = sx - view_x
    y = sy - view_y
    z = sz - view_z

    # ecef2lla (faithful to the PyTorch module: plain arctan for lon, quirky
    # constants preserved). Ratios routed through the EUP reciprocal.
    p = jnp.sqrt(x * x + y * y)
    theta = _atan((z * a_c) * pl.reciprocal(p * b_c, approx=False))
    lon = _atan(y * pl.reciprocal(x, approx=False))
    st = jnp.sin(theta)
    ct = jnp.cos(theta)
    first = z + e2_sq * b_c * st * st * st
    second = p - e_sq * a_c * ct * ct * ct
    lat = _atan(first * pl.reciprocal(second, approx=False))

    # Lane-dense output slab: [lat_deg | lon_deg] == [az | alt].
    out_ref[:, 0:P] = lat * rad2deg
    out_ref[:, P:2 * P] = lon * rad2deg


# ---------------------------------------------------------------------------
# Host-side helpers (pure parameter / constant glue).
# ---------------------------------------------------------------------------
def _gps_to_ecef_custom(lat, lon, alt):
    # Mirrors Module.gps_to_ecef_custom in float32 (quirks preserved:
    # no sqrt in N_phi, z_view uses cos(lat)*cos(lon)).
    eq = np.float32(6378.137)
    po = np.float32(6356.7523)
    rad_lat = np.float32(lat) * np.float32(np.pi) / np.float32(180.0)
    rad_lon = np.float32(lon) * np.float32(np.pi) / np.float32(180.0)
    e2 = np.float32(1.0 - float(po) ** 2 / float(eq) ** 2)
    sin_phi = np.float32(np.sin(rad_lat))
    n_phi = eq / (np.float32(1.0) - e2 * sin_phi * sin_phi)
    cos_lat = np.float32(np.cos(rad_lat))
    cos_lon = np.float32(np.cos(rad_lon))
    sin_lon = np.float32(np.sin(rad_lon))
    x_view = (n_phi + np.float32(alt)) * cos_lat * cos_lon
    y_view = (n_phi + np.float32(alt)) * cos_lat * sin_lon
    z_view = (n_phi * (np.float32(1.0) - e2) + np.float32(alt)) * cos_lat * cos_lon
    return float(x_view), float(y_view), float(z_view)


def init_params(key, planet):
    """Deterministic nn.Linear-style init (uniform +/- 1/sqrt(fan_in))."""
    def linear(k, in_f, out_f):
        k1, k2 = jax.random.split(k)
        bound = 1.0 / np.sqrt(in_f)
        w = jax.random.uniform(k1, (out_f, in_f), jnp.float32, -bound, bound)
        b = jax.random.uniform(k2, (out_f,), jnp.float32, -bound, bound)
        return w, b

    keys = jax.random.split(key, 7)
    p = {}
    p["phi1"] = linear(keys[0], planet, planet)
    p["theta1"] = linear(keys[1], planet, planet)
    p["radius1"] = linear(keys[2], planet, planet)
    p["manda"] = linear(keys[3], planet, planet)
    p["phi2"] = linear(keys[4], 1, planet)
    p["theta2"] = linear(keys[5], planet, planet)
    p["radius2"] = linear(keys[6], 1, planet)
    return p


@functools.partial(jax.jit, static_argnames=("latitude", "longitude"))
def lata_forward(t, params, latitude, longitude):
    """Runs Module.forward(t) as one fused Pallas TPU kernel. Returns (B, P, 2)."""
    B, P = t.shape

    # Observer ECEF position (compile-time constants: latitude/longitude static).
    view_x, view_y, view_z = _gps_to_ecef_custom(latitude, longitude, 6378.137)

    # ecef2lla constants (float32, as in the PyTorch module).
    a_c = np.float32(6378137.0)
    b_c = np.float32(6356800.0)
    e = np.float32(np.sqrt((float(a_c) ** 2 - float(b_c) ** 2) / float(a_c) ** 2))
    e2 = np.float32(np.sqrt((float(a_c) ** 2 - float(b_c) ** 2) / float(b_c) ** 2))
    e_sq = np.float32(e * e)
    e2_sq = np.float32(e2 * e2)
    rad2deg = np.float32(180.0 / np.pi)

    def wt(name):  # pre-transpose weight to (in, out)
        return jnp.transpose(params[name][0]).astype(jnp.float32)

    # Packed weight slab (P, 5P).
    w_slab = jnp.concatenate(
        [wt("phi1"), wt("theta1"), wt("radius1"), wt("theta2"), wt("manda")],
        axis=1)

    # Linear(1, P) applied to ones(B, 1) collapses to w[:,0] + b; hoist the
    # batch-invariant r2*sin(phi2) / r2*cos(phi2) into the vector slab (1, 7P).
    phi2 = params["phi2"][0][:, 0] + params["phi2"][1]
    r2 = params["radius2"][0][:, 0] + params["radius2"][1]
    v_slab = jnp.concatenate(
        [params["phi1"][1], params["theta1"][1], params["radius1"][1],
         params["theta2"][1], params["manda"][1],
         r2 * jnp.sin(phi2), r2 * jnp.cos(phi2)]
    ).astype(jnp.float32).reshape(1, 7 * P)

    kernel = functools.partial(
        _lata_kernel, P,
        np.float32(view_x), np.float32(view_y), np.float32(view_z),
        a_c, b_c, e_sq, e2_sq, rad2deg)

    out = pl.pallas_call(
        kernel,
        grid=(1,),                                       # single step, single core
        in_specs=[
            pl.BlockSpec((B, P), lambda i: (0, 0)),      # t: whole batch
            pl.BlockSpec((P, 5 * P), lambda i: (0, 0)),  # weight slab
            pl.BlockSpec((1, 7 * P), lambda i: (0, 0)),  # vector slab
        ],
        out_specs=pl.BlockSpec((B, 2 * P), lambda i: (0, 0)),
        out_shape=jax.ShapeDtypeStruct((B, 2 * P), jnp.float32),
        compiler_params=pltpu.CompilerParams(dimension_semantics=("arbitrary",)),
    )(t, w_slab, v_slab)

    # positions = torch.stack([az, alt], dim=-1); az = lat_deg, alt = lon_deg.
    lat_deg = out[:, 0:P]
    lon_deg = out[:, P:2 * P]
    return jnp.stack([lat_deg, lon_deg], axis=-1)


if __name__ == "__main__":
    PLANET = 8        # args.planet
    BATCH = 16        # whole batch in one grid step
    LATITUDE = 40.0   # args.latitude
    LONGITUDE = -74.0  # args.longtitude

    key = jax.random.PRNGKey(0)
    k_params, k_t = jax.random.split(key)
    params = init_params(k_params, PLANET)
    t = jax.random.normal(k_t, (BATCH, PLANET), dtype=jnp.float32)

    positions = lata_forward(t, params, LATITUDE, LONGITUDE)
    positions = jax.block_until_ready(positions)
    assert positions.shape == (BATCH, PLANET, 2)
    assert positions.dtype == jnp.float32
    assert bool(jnp.all(jnp.isfinite(positions)))
    print("KERNEL_OK")
</pallas_src>

<mosaic_0001>
module attributes {stable_mosaic.version = 11 : i64} {
  func.func @_lata_kernel(%arg0: i32, %arg1: memref<16x8xf32, #tpu.memory_space<vmem>>, %arg2: memref<8x40xf32, #tpu.memory_space<vmem>>, %arg3: memref<1x56xf32, #tpu.memory_space<vmem>>, %arg4: memref<16x16xf32, #tpu.memory_space<vmem>>) attributes {dimension_semantics = [#tpu.dimension_semantics<arbitrary>], iteration_bounds = array<i64: 1>, scalar_prefetch = 0 : i64, scratch_operands = 0 : i64, tpu.core_type = #tpu.core_type<tc>, window_params = [{pipeline_mode = #tpu.pipeline_mode<synchronous>, transform_indices = @transform_0, window_bounds = array<i64: 16, 8>}, {pipeline_mode = #tpu.pipeline_mode<synchronous>, transform_indices = @transform_1, window_bounds = array<i64: 8, 40>}, {pipeline_mode = #tpu.pipeline_mode<synchronous>, transform_indices = @transform_2, window_bounds = array<i64: 1, 56>}, {pipeline_mode = #tpu.pipeline_mode<synchronous>, transform_indices = @transform_3, window_bounds = array<i64: 16, 16>}]} {
    %c0 = arith.constant 0 : index
    %c0_0 = arith.constant 0 : index
    %0 = vector.load %arg1[%c0, %c0_0] : memref<16x8xf32, #tpu.memory_space<vmem>>, vector<16x8xf32>
    %c0_1 = arith.constant 0 : index
    %c0_2 = arith.constant 0 : index
    %1 = vector.load %arg2[%c0_1, %c0_2] : memref<8x40xf32, #tpu.memory_space<vmem>>, vector<8x40xf32>
    %c0_3 = arith.constant 0 : index
    %c0_4 = arith.constant 0 : index
    %2 = vector.load %arg3[%c0_3, %c0_4] : memref<1x56xf32, #tpu.memory_space<vmem>>, vector<1x56xf32>
    %3 = vector.extract_strided_slice %2 {offsets = [0, 0], sizes = [1, 32], strides = [1, 1]} : vector<1x56xf32> to vector<1x32xf32>
    %4 = vector.extract_strided_slice %0 {offsets = [0, 0], sizes = [16, 1], strides = [1, 1]} : vector<16x8xf32> to vector<16x1xf32>
    %5 = vector.extract_strided_slice %1 {offsets = [0, 0], sizes = [1, 32], strides = [1, 1]} : vector<8x40xf32> to vector<1x32xf32>
    %6 = vector.broadcast %4 : vector<16x1xf32> to vector<16x32xf32>
    %7 = vector.broadcast %5 : vector<1x32xf32> to vector<16x32xf32>
    %8 = arith.mulf %6, %7 : vector<16x32xf32>
    %9 = vector.broadcast %3 : vector<1x32xf32> to vector<16x32xf32>
    %10 = arith.addf %9, %8 : vector<16x32xf32>
    %11 = vector.extract_strided_slice %0 {offsets = [0, 1], sizes = [16, 1], strides = [1, 1]} : vector<16x8xf32> to vector<16x1xf32>
    %12 = vector.extract_strided_slice %1 {offsets = [1, 0], sizes = [1, 32], strides = [1, 1]} : vector<8x40xf32> to vector<1x32xf32>
    %13 = vector.broadcast %11 : vector<16x1xf32> to vector<16x32xf32>
    %14 = vector.broadcast %12 : vector<1x32xf32> to vector<16x32xf32>
    %15 = arith.mulf %13, %14 : vector<16x32xf32>
    %16 = arith.addf %10, %15 : vector<16x32xf32>
    %17 = vector.extract_strided_slice %0 {offsets = [0, 2], sizes = [16, 1], strides = [1, 1]} : vector<16x8xf32> to vector<16x1xf32>
    %18 = vector.extract_strided_slice %1 {offsets = [2, 0], sizes = [1, 32], strides = [1, 1]} : vector<8x40xf32> to vector<1x32xf32>
    %19 = vector.broadcast %17 : vector<16x1xf32> to vector<16x32xf32>
    %20 = vector.broadcast %18 : vector<1x32xf32> to vector<16x32xf32>
    %21 = arith.mulf %19, %20 : vector<16x32xf32>
    %22 = arith.addf %16, %21 : vector<16x32xf32>
    %23 = vector.extract_strided_slice %0 {offsets = [0, 3], sizes = [16, 1], strides = [1, 1]} : vector<16x8xf32> to vector<16x1xf32>
    %24 = vector.extract_strided_slice %1 {offsets = [3, 0], sizes = [1, 32], strides = [1, 1]} : vector<8x40xf32> to vector<1x32xf32>
    %25 = vector.broadcast %23 : vector<16x1xf32> to vector<16x32xf32>
    %26 = vector.broadcast %24 : vector<1x32xf32> to vector<16x32xf32>
    %27 = arith.mulf %25, %26 : vector<16x32xf32>
    %28 = arith.addf %22, %27 : vector<16x32xf32>
    %29 = vector.extract_strided_slice %0 {offsets = [0, 4], sizes = [16, 1], strides = [1, 1]} : vector<16x8xf32> to vector<16x1xf32>
    %30 = vector.extract_strided_slice %1 {offsets = [4, 0], sizes = [1, 32], strides = [1, 1]} : vector<8x40xf32> to vector<1x32xf32>
    %31 = vector.broadcast %29 : vector<16x1xf32> to vector<16x32xf32>
    %32 = vector.broadcast %30 : vector<1x32xf32> to vector<16x32xf32>
    %33 = arith.mulf %31, %32 : vector<16x32xf32>
    %34 = arith.addf %28, %33 : vector<16x32xf32>
    %35 = vector.extract_strided_slice %0 {offsets = [0, 5], sizes = [16, 1], strides = [1, 1]} : vector<16x8xf32> to vector<16x1xf32>
    %36 = vector.extract_strided_slice %1 {offsets = [5, 0], sizes = [1, 32], strides = [1, 1]} : vector<8x40xf32> to vector<1x32xf32>
    %37 = vector.broadcast %35 : vector<16x1xf32> to vector<16x32xf32>
    %38 = vector.broadcast %36 : vector<1x32xf32> to vector<16x32xf32>
    %39 = arith.mulf %37, %38 : vector<16x32xf32>
    %40 = arith.addf %34, %39 : vector<16x32xf32>
    %41 = vector.extract_strided_slice %0 {offsets = [0, 6], sizes = [16, 1], strides = [1, 1]} : vector<16x8xf32> to vector<16x1xf32>
    %42 = vector.extract_strided_slice %1 {offsets = [6, 0], sizes = [1, 32], strides = [1, 1]} : vector<8x40xf32> to vector<1x32xf32>
    %43 = vector.broadcast %41 : vector<16x1xf32> to vector<16x32xf32>
    %44 = vector.broadcast %42 : vector<1x32xf32> to vector<16x32xf32>
    %45 = arith.mulf %43, %44 : vector<16x32xf32>
    %46 = arith.addf %40, %45 : vector<16x32xf32>
    %47 = vector.extract_strided_slice %0 {offsets = [0, 7], sizes = [16, 1], strides = [1, 1]} : vector<16x8xf32> to vector<16x1xf32>
    %48 = vector.extract_strided_slice %1 {offsets = [7, 0], sizes = [1, 32], strides = [1, 1]} : vector<8x40xf32> to vector<1x32xf32>
    %49 = vector.broadcast %47 : vector<16x1xf32> to vector<16x32xf32>
    %50 = vector.broadcast %48 : vector<1x32xf32> to vector<16x32xf32>
    %51 = arith.mulf %49, %50 : vector<16x32xf32>
    %52 = arith.addf %46, %51 : vector<16x32xf32>
    %53 = math.sin %52 : vector<16x32xf32>
    %54 = math.cos %52 : vector<16x32xf32>
    %55 = vector.extract_strided_slice %53 {offsets = [0, 0], sizes = [16, 8], strides = [1, 1]} : vector<16x32xf32> to vector<16x8xf32>
    %56 = vector.extract_strided_slice %54 {offsets = [0, 0], sizes = [16, 8], strides = [1, 1]} : vector<16x32xf32> to vector<16x8xf32>
    %57 = vector.extract_strided_slice %53 {offsets = [0, 8], sizes = [16, 8], strides = [1, 1]} : vector<16x32xf32> to vector<16x8xf32>
    %58 = vector.extract_strided_slice %54 {offsets = [0, 8], sizes = [16, 8], strides = [1, 1]} : vector<16x32xf32> to vector<16x8xf32>
    %59 = vector.extract_strided_slice %52 {offsets = [0, 16], sizes = [16, 8], strides = [1, 1]} : vector<16x32xf32> to vector<16x8xf32>
    %60 = vector.extract_strided_slice %53 {offsets = [0, 24], sizes = [16, 8], strides = [1, 1]} : vector<16x32xf32> to vector<16x8xf32>
    %61 = vector.extract_strided_slice %54 {offsets = [0, 24], sizes = [16, 8], strides = [1, 1]} : vector<16x32xf32> to vector<16x8xf32>
    %62 = arith.mulf %55, %57 : vector<16x8xf32>
    %63 = arith.mulf %62, %59 : vector<16x8xf32>
    %64 = arith.mulf %55, %58 : vector<16x8xf32>
    %65 = arith.mulf %64, %59 : vector<16x8xf32>
    %66 = arith.mulf %56, %59 : vector<16x8xf32>
    %67 = vector.extract_strided_slice %2 {offsets = [0, 32], sizes = [1, 8], strides = [1, 1]} : vector<1x56xf32> to vector<1x8xf32>
    %68 = vector.extract_strided_slice %66 {offsets = [0, 0], sizes = [16, 1], strides = [1, 1]} : vector<16x8xf32> to vector<16x1xf32>
    %69 = vector.extract_strided_slice %1 {offsets = [0, 32], sizes = [1, 8], strides = [1, 1]} : vector<8x40xf32> to vector<1x8xf32>
    %70 = vector.broadcast %68 : vector<16x1xf32> to vector<16x8xf32>
    %71 = vector.broadcast %69 : vector<1x8xf32> to vector<16x8xf32>
    %72 = arith.mulf %70, %71 : vector<16x8xf32>
    %73 = vector.broadcast %67 : vector<1x8xf32> to vector<16x8xf32>
    %74 = arith.addf %73, %72 : vector<16x8xf32>
    %75 = vector.extract_strided_slice %66 {offsets = [0, 1], sizes = [16, 1], strides = [1, 1]} : vector<16x8xf32> to vector<16x1xf32>
    %76 = vector.extract_strided_slice %1 {offsets = [1, 32], sizes = [1, 8], strides = [1, 1]} : vector<8x40xf32> to vector<1x8xf32>
    %77 = vector.broadcast %75 : vector<16x1xf32> to vector<16x8xf32>
    %78 = vector.broadcast %76 : vector<1x8xf32> to vector<16x8xf32>
    %79 = arith.mulf %77, %78 : vector<16x8xf32>
    %80 = arith.addf %74, %79 : vector<16x8xf32>
    %81 = vector.extract_strided_slice %66 {offsets = [0, 2], sizes = [16, 1], strides = [1, 1]} : vector<16x8xf32> to vector<16x1xf32>
    %82 = vector.extract_strided_slice %1 {offsets = [2, 32], sizes = [1, 8], strides = [1, 1]} : vector<8x40xf32> to vector<1x8xf32>
    %83 = vector.broadcast %81 : vector<16x1xf32> to vector<16x8xf32>
    %84 = vector.broadcast %82 : vector<1x8xf32> to vector<16x8xf32>
    %85 = arith.mulf %83, %84 : vector<16x8xf32>
    %86 = arith.addf %80, %85 : vector<16x8xf32>
    %87 = vector.extract_strided_slice %66 {offsets = [0, 3], sizes = [16, 1], strides = [1, 1]} : vector<16x8xf32> to vector<16x1xf32>
    %88 = vector.extract_strided_slice %1 {offsets = [3, 32], sizes = [1, 8], strides = [1, 1]} : vector<8x40xf32> to vector<1x8xf32>
    %89 = vector.broadcast %87 : vector<16x1xf32> to vector<16x8xf32>
    %90 = vector.broadcast %88 : vector<1x8xf32> to vector<16x8xf32>
    %91 = arith.mulf %89, %90 : vector<16x8xf32>
    %92 = arith.addf %86, %91 : vector<16x8xf32>
    %93 = vector.extract_strided_slice %66 {offsets = [0, 4], sizes = [16, 1], strides = [1, 1]} : vector<16x8xf32> to vector<16x1xf32>
    %94 = vector.extract_strided_slice %1 {offsets = [4, 32], sizes = [1, 8], strides = [1, 1]} : vector<8x40xf32> to vector<1x8xf32>
    %95 = vector.broadcast %93 : vector<16x1xf32> to vector<16x8xf32>
    %96 = vector.broadcast %94 : vector<1x8xf32> to vector<16x8xf32>
    %97 = arith.mulf %95, %96 : vector<16x8xf32>
    %98 = arith.addf %92, %97 : vector<16x8xf32>
    %99 = vector.extract_strided_slice %66 {offsets = [0, 5], sizes = [16, 1], strides = [1, 1]} : vector<16x8xf32> to vector<16x1xf32>
    %100 = vector.extract_strided_slice %1 {offsets = [5, 32], sizes = [1, 8], strides = [1, 1]} : vector<8x40xf32> to vector<1x8xf32>
    %101 = vector.broadcast %99 : vector<16x1xf32> to vector<16x8xf32>
    %102 = vector.broadcast %100 : vector<1x8xf32> to vector<16x8xf32>
    %103 = arith.mulf %101, %102 : vector<16x8xf32>
    %104 = arith.addf %98, %103 : vector<16x8xf32>
    %105 = vector.extract_strided_slice %66 {offsets = [0, 6], sizes = [16, 1], strides = [1, 1]} : vector<16x8xf32> to vector<16x1xf32>
    %106 = vector.extract_strided_slice %1 {offsets = [6, 32], sizes = [1, 8], strides = [1, 1]} : vector<8x40xf32> to vector<1x8xf32>
    %107 = vector.broadcast %105 : vector<16x1xf32> to vector<16x8xf32>
    %108 = vector.broadcast %106 : vector<1x8xf32> to vector<16x8xf32>
    %109 = arith.mulf %107, %108 : vector<16x8xf32>
    %110 = arith.addf %104, %109 : vector<16x8xf32>
    %111 = vector.extract_strided_slice %66 {offsets = [0, 7], sizes = [16, 1], strides = [1, 1]} : vector<16x8xf32> to vector<16x1xf32>
    %112 = vector.extract_strided_slice %1 {offsets = [7, 32], sizes = [1, 8], strides = [1, 1]} : vector<8x40xf32> to vector<1x8xf32>
    %113 = vector.broadcast %111 : vector<16x1xf32> to vector<16x8xf32>
    %114 = vector.broadcast %112 : vector<1x8xf32> to vector<16x8xf32>
    %115 = arith.mulf %113, %114 : vector<16x8xf32>
    %116 = arith.addf %110, %115 : vector<16x8xf32>
    %117 = vector.extract_strided_slice %2 {offsets = [0, 40], sizes = [1, 8], strides = [1, 1]} : vector<1x56xf32> to vector<1x8xf32>
    %118 = vector.extract_strided_slice %2 {offsets = [0, 48], sizes = [1, 8], strides = [1, 1]} : vector<1x56xf32> to vector<1x8xf32>
    %119 = vector.broadcast %117 : vector<1x8xf32> to vector<16x8xf32>
    %120 = arith.mulf %119, %61 : vector<16x8xf32>
    %121 = arith.addf %120, %63 : vector<16x8xf32>
    %122 = vector.broadcast %117 : vector<1x8xf32> to vector<16x8xf32>
    %123 = arith.mulf %122, %60 : vector<16x8xf32>
    %124 = arith.addf %123, %65 : vector<16x8xf32>
    %125 = vector.broadcast %118 : vector<1x8xf32> to vector<16x8xf32>
    %126 = arith.addf %125, %116 : vector<16x8xf32>
    %cst = arith.constant 2697.22803 : f32
    %127 = vector.broadcast %cst : f32 to vector<16x8xf32>
    %128 = arith.subf %121, %127 : vector<16x8xf32>
    %cst_5 = arith.constant -9406.35351 : f32
    %129 = vector.broadcast %cst_5 : f32 to vector<16x8xf32>
    %130 = arith.subf %124, %129 : vector<16x8xf32>
    %cst_6 = arith.constant 2688.18726 : f32
    %131 = vector.broadcast %cst_6 : f32 to vector<16x8xf32>
    %132 = arith.subf %126, %131 : vector<16x8xf32>
    %133 = arith.mulf %128, %128 : vector<16x8xf32>
    %134 = arith.mulf %130, %130 : vector<16x8xf32>
    %135 = arith.addf %133, %134 : vector<16x8xf32>
    %136 = math.sqrt %135 : vector<16x8xf32>
    %cst_7 = arith.constant 0x4AC2A532 : f32
    %137 = vector.broadcast %cst_7 : f32 to vector<16x8xf32>
    %138 = arith.mulf %132, %137 : vector<16x8xf32>
    %cst_8 = arith.constant 6.356800e+06 : f32
    %139 = vector.broadcast %cst_8 : f32 to vector<16x8xf32>
    %140 = arith.mulf %136, %139 : vector<16x8xf32>
    %141 = tpu.reciprocal %140 : vector<16x8xf32> -> vector<16x8xf32>
    %142 = arith.mulf %138, %141 : vector<16x8xf32>
    %cst_9 = arith.constant 0.000000e+00 : f32
    %143 = vector.broadcast %cst_9 : f32 to vector<16x8xf32>
    %144 = arith.cmpf olt, %142, %143 : vector<16x8xf32>
    %cst_10 = arith.constant -1.000000e+00 : f32
    %cst_11 = arith.constant 1.000000e+00 : f32
    %145 = vector.broadcast %cst_10 : f32 to vector<16x8xf32>
    %146 = vector.broadcast %cst_11 : f32 to vector<16x8xf32>
    %147 = arith.select %144, %145, %146 : vector<16x8xi1>, vector<16x8xf32>
    %148 = math.absf %142 : vector<16x8xf32>
    %cst_12 = arith.constant 2.41421366 : f32
    %149 = vector.broadcast %cst_12 : f32 to vector<16x8xf32>
    %150 = arith.cmpf ogt, %148, %149 : vector<16x8xf32>
    %cst_13 = arith.constant 0.414213568 : f32
    %151 = vector.broadcast %cst_13 : f32 to vector<16x8xf32>
    %152 = arith.cmpf ogt, %148, %151 : vector<16x8xf32>
    %cst_14 = arith.constant dense<true> : vector<16x8xi1>
    %153 = arith.xori %150, %cst_14 : vector<16x8xi1>
    %154 = arith.andi %152, %153 : vector<16x8xi1>
    %cst_15 = arith.constant 1.000000e+00 : f32
    %155 = vector.broadcast %cst_15 : f32 to vector<16x8xf32>
    %156 = arith.subf %148, %155 : vector<16x8xf32>
    %157 = arith.select %154, %156, %148 : vector<16x8xi1>, vector<16x8xf32>
    %cst_16 = arith.constant -1.000000e+00 : f32
    %158 = vector.broadcast %cst_16 : f32 to vector<16x8xf32>
    %159 = arith.select %150, %158, %157 : vector<16x8xi1>, vector<16x8xf32>
    %cst_17 = arith.constant 1.000000e+00 : f32
    %160 = vector.broadcast %cst_17 : f32 to vector<16x8xf32>
    %161 = arith.addf %148, %160 : vector<16x8xf32>
    %cst_18 = arith.constant 1.000000e+00 : f32
    %162 = vector.broadcast %cst_18 : f32 to vector<16x8xf32>
    %163 = arith.select %154, %161, %162 : vector<16x8xi1>, vector<16x8xf32>
    %164 = arith.select %150, %148, %163 : vector<16x8xi1>, vector<16x8xf32>
    %165 = arith.divf %159, %164 : vector<16x8xf32>
    %cst_19 = arith.constant 0.785398185 : f32
    %cst_20 = arith.constant 0.000000e+00 : f32
    %166 = vector.broadcast %cst_19 : f32 to vector<16x8xf32>
    %167 = vector.broadcast %cst_20 : f32 to vector<16x8xf32>
    %168 = arith.select %154, %166, %167 : vector<16x8xi1>, vector<16x8xf32>
    %cst_21 = arith.constant 1.57079637 : f32
    %169 = vector.broadcast %cst_21 : f32 to vector<16x8xf32>
    %170 = arith.select %150, %169, %168 : vector<16x8xi1>, vector<16x8xf32>
    %171 = arith.mulf %165, %165 : vector<16x8xf32>
    %cst_22 = arith.constant 0.0805374458 : f32
    %172 = vector.broadcast %cst_22 : f32 to vector<16x8xf32>
    %173 = arith.mulf %172, %171 : vector<16x8xf32>
    %cst_23 = arith.constant 0.138776854 : f32
    %174 = vector.broadcast %cst_23 : f32 to vector<16x8xf32>
    %175 = arith.subf %173, %174 : vector<16x8xf32>
    %176 = arith.mulf %175, %171 : vector<16x8xf32>
    %cst_24 = arith.constant 0.199777111 : f32
    %177 = vector.broadcast %cst_24 : f32 to vector<16x8xf32>
    %178 = arith.addf %176, %177 : vector<16x8xf32>
    %179 = arith.mulf %178, %171 : vector<16x8xf32>
    %cst_25 = arith.constant 0.333329499 : f32
    %180 = vector.broadcast %cst_25 : f32 to vector<16x8xf32>
    %181 = arith.subf %179, %180 : vector<16x8xf32>
    %182 = arith.mulf %181, %171 : vector<16x8xf32>
    %183 = arith.mulf %182, %165 : vector<16x8xf32>
    %184 = arith.addf %183, %165 : vector<16x8xf32>
    %185 = arith.addf %170, %184 : vector<16x8xf32>
    %186 = arith.mulf %147, %185 : vector<16x8xf32>
    %187 = tpu.reciprocal %128 : vector<16x8xf32> -> vector<16x8xf32>
    %188 = arith.mulf %130, %187 : vector<16x8xf32>
    %cst_26 = arith.constant 0.000000e+00 : f32
    %189 = vector.broadcast %cst_26 : f32 to vector<16x8xf32>
    %190 = arith.cmpf olt, %188, %189 : vector<16x8xf32>
    %cst_27 = arith.constant -1.000000e+00 : f32
    %cst_28 = arith.constant 1.000000e+00 : f32
    %191 = vector.broadcast %cst_27 : f32 to vector<16x8xf32>
    %192 = vector.broadcast %cst_28 : f32 to vector<16x8xf32>
    %193 = arith.select %190, %191, %192 : vector<16x8xi1>, vector<16x8xf32>
    %194 = math.absf %188 : vector<16x8xf32>
    %cst_29 = arith.constant 2.41421366 : f32
    %195 = vector.broadcast %cst_29 : f32 to vector<16x8xf32>
    %196 = arith.cmpf ogt, %194, %195 : vector<16x8xf32>
    %cst_30 = arith.constant 0.414213568 : f32
    %197 = vector.broadcast %cst_30 : f32 to vector<16x8xf32>
    %198 = arith.cmpf ogt, %194, %197 : vector<16x8xf32>
    %cst_31 = arith.constant dense<true> : vector<16x8xi1>
    %199 = arith.xori %196, %cst_31 : vector<16x8xi1>
    %200 = arith.andi %198, %199 : vector<16x8xi1>
    %cst_32 = arith.constant 1.000000e+00 : f32
    %201 = vector.broadcast %cst_32 : f32 to vector<16x8xf32>
    %202 = arith.subf %194, %201 : vector<16x8xf32>
    %203 = arith.select %200, %202, %194 : vector<16x8xi1>, vector<16x8xf32>
    %cst_33 = arith.constant -1.000000e+00 : f32
    %204 = vector.broadcast %cst_33 : f32 to vector<16x8xf32>
    %205 = arith.select %196, %204, %203 : vector<16x8xi1>, vector<16x8xf32>
    %cst_34 = arith.constant 1.000000e+00 : f32
    %206 = vector.broadcast %cst_34 : f32 to vector<16x8xf32>
    %207 = arith.addf %194, %206 : vector<16x8xf32>
    %cst_35 = arith.constant 1.000000e+00 : f32
    %208 = vector.broadcast %cst_35 : f32 to vector<16x8xf32>
    %209 = arith.select %200, %207, %208 : vector<16x8xi1>, vector<16x8xf32>
    %210 = arith.select %196, %194, %209 : vector<16x8xi1>, vector<16x8xf32>
    %211 = arith.divf %205, %210 : vector<16x8xf32>
    %cst_36 = arith.constant 0.785398185 : f32
    %cst_37 = arith.constant 0.000000e+00 : f32
    %212 = vector.broadcast %cst_36 : f32 to vector<16x8xf32>
    %213 = vector.broadcast %cst_37 : f32 to vector<16x8xf32>
    %214 = arith.select %200, %212, %213 : vector<16x8xi1>, vector<16x8xf32>
    %cst_38 = arith.constant 1.57079637 : f32
    %215 = vector.broadcast %cst_38 : f32 to vector<16x8xf32>
    %216 = arith.select %196, %215, %214 : vector<16x8xi1>, vector<16x8xf32>
    %217 = arith.mulf %211, %211 : vector<16x8xf32>
    %cst_39 = arith.constant 0.0805374458 : f32
    %218 = vector.broadcast %cst_39 : f32 to vector<16x8xf32>
    %219 = arith.mulf %218, %217 : vector<16x8xf32>
    %cst_40 = arith.constant 0.138776854 : f32
    %220 = vector.broadcast %cst_40 : f32 to vector<16x8xf32>
    %221 = arith.subf %219, %220 : vector<16x8xf32>
    %222 = arith.mulf %221, %217 : vector<16x8xf32>
    %cst_41 = arith.constant 0.199777111 : f32
    %223 = vector.broadcast %cst_41 : f32 to vector<16x8xf32>
    %224 = arith.addf %222, %223 : vector<16x8xf32>
    %225 = arith.mulf %224, %217 : vector<16x8xf32>
    %cst_42 = arith.constant 0.333329499 : f32
    %226 = vector.broadcast %cst_42 : f32 to vector<16x8xf32>
    %227 = arith.subf %225, %226 : vector<16x8xf32>
    %228 = arith.mulf %227, %217 : vector<16x8xf32>
    %229 = arith.mulf %228, %211 : vector<16x8xf32>
    %230 = arith.addf %229, %211 : vector<16x8xf32>
    %231 = arith.addf %216, %230 : vector<16x8xf32>
    %232 = arith.mulf %193, %231 : vector<16x8xf32>
    %233 = math.sin %186 : vector<16x8xf32>
    %234 = math.cos %186 : vector<16x8xf32>
    %cst_43 = arith.constant 42745.6172 : f32
    %235 = vector.broadcast %cst_43 : f32 to vector<16x8xf32>
    %236 = arith.mulf %235, %233 : vector<16x8xf32>
    %237 = arith.mulf %236, %233 : vector<16x8xf32>
    %238 = arith.mulf %237, %233 : vector<16x8xf32>
    %239 = arith.addf %132, %238 : vector<16x8xf32>
    %cst_44 = arith.constant 42602.625 : f32
    %240 = vector.broadcast %cst_44 : f32 to vector<16x8xf32>
    %241 = arith.mulf %240, %234 : vector<16x8xf32>
    %242 = arith.mulf %241, %234 : vector<16x8xf32>
    %243 = arith.mulf %242, %234 : vector<16x8xf32>
    %244 = arith.subf %136, %243 : vector<16x8xf32>
    %245 = tpu.reciprocal %244 : vector<16x8xf32> -> vector<16x8xf32>
    %246 = arith.mulf %239, %245 : vector<16x8xf32>
    %cst_45 = arith.constant 0.000000e+00 : f32
    %247 = vector.broadcast %cst_45 : f32 to vector<16x8xf32>
    %248 = arith.cmpf olt, %246, %247 : vector<16x8xf32>
    %cst_46 = arith.constant -1.000000e+00 : f32
    %cst_47 = arith.constant 1.000000e+00 : f32
    %249 = vector.broadcast %cst_46 : f32 to vector<16x8xf32>
    %250 = vector.broadcast %cst_47 : f32 to vector<16x8xf32>
    %251 = arith.select %248, %249, %250 : vector<16x8xi1>, vector<16x8xf32>
    %252 = math.absf %246 : vector<16x8xf32>
    %cst_48 = arith.constant 2.41421366 : f32
    %253 = vector.broadcast %cst_48 : f32 to vector<16x8xf32>
    %254 = arith.cmpf ogt, %252, %253 : vector<16x8xf32>
    %cst_49 = arith.constant 0.414213568 : f32
    %255 = vector.broadcast %cst_49 : f32 to vector<16x8xf32>
    %256 = arith.cmpf ogt, %252, %255 : vector<16x8xf32>
    %cst_50 = arith.constant dense<true> : vector<16x8xi1>
    %257 = arith.xori %254, %cst_50 : vector<16x8xi1>
    %258 = arith.andi %256, %257 : vector<16x8xi1>
    %cst_51 = arith.constant 1.000000e+00 : f32
    %259 = vector.broadcast %cst_51 : f32 to vector<16x8xf32>
    %260 = arith.subf %252, %259 : vector<16x8xf32>
    %261 = arith.select %258, %260, %252 : vector<16x8xi1>, vector<16x8xf32>
    %cst_52 = arith.constant -1.000000e+00 : f32
    %262 = vector.broadcast %cst_52 : f32 to vector<16x8xf32>
    %263 = arith.select %254, %262, %261 : vector<16x8xi1>, vector<16x8xf32>
    %cst_53 = arith.constant 1.000000e+00 : f32
    %264 = vector.broadcast %cst_53 : f32 to vector<16x8xf32>
    %265 = arith.addf %252, %264 : vector<16x8xf32>
    %cst_54 = arith.constant 1.000000e+00 : f32
    %266 = vector.broadcast %cst_54 : f32 to vector<16x8xf32>
    %267 = arith.select %258, %265, %266 : vector<16x8xi1>, vector<16x8xf32>
    %268 = arith.select %254, %252, %267 : vector<16x8xi1>, vector<16x8xf32>
    %269 = arith.divf %263, %268 : vector<16x8xf32>
    %cst_55 = arith.constant 0.785398185 : f32
    %cst_56 = arith.constant 0.000000e+00 : f32
    %270 = vector.broadcast %cst_55 : f32 to vector<16x8xf32>
    %271 = vector.broadcast %cst_56 : f32 to vector<16x8xf32>
    %272 = arith.select %258, %270, %271 : vector<16x8xi1>, vector<16x8xf32>
    %cst_57 = arith.constant 1.57079637 : f32
    %273 = vector.broadcast %cst_57 : f32 to vector<16x8xf32>
    %274 = arith.select %254, %273, %272 : vector<16x8xi1>, vector<16x8xf32>
    %275 = arith.mulf %269, %269 : vector<16x8xf32>
    %cst_58 = arith.constant 0.0805374458 : f32
    %276 = vector.broadcast %cst_58 : f32 to vector<16x8xf32>
    %277 = arith.mulf %276, %275 : vector<16x8xf32>
    %cst_59 = arith.constant 0.138776854 : f32
    %278 = vector.broadcast %cst_59 : f32 to vector<16x8xf32>
    %279 = arith.subf %277, %278 : vector<16x8xf32>
    %280 = arith.mulf %279, %275 : vector<16x8xf32>
    %cst_60 = arith.constant 0.199777111 : f32
    %281 = vector.broadcast %cst_60 : f32 to vector<16x8xf32>
    %282 = arith.addf %280, %281 : vector<16x8xf32>
    %283 = arith.mulf %282, %275 : vector<16x8xf32>
    %cst_61 = arith.constant 0.333329499 : f32
    %284 = vector.broadcast %cst_61 : f32 to vector<16x8xf32>
    %285 = arith.subf %283, %284 : vector<16x8xf32>
    %286 = arith.mulf %285, %275 : vector<16x8xf32>
    %287 = arith.mulf %286, %269 : vector<16x8xf32>
    %288 = arith.addf %287, %269 : vector<16x8xf32>
    %289 = arith.addf %274, %288 : vector<16x8xf32>
    %290 = arith.mulf %251, %289 : vector<16x8xf32>
    %cst_62 = arith.constant 57.2957802 : f32
    %291 = vector.broadcast %cst_62 : f32 to vector<16x8xf32>
    %292 = arith.mulf %290, %291 : vector<16x8xf32>
    %c0_63 = arith.constant 0 : index
    %c0_64 = arith.constant 0 : index
    %293 = vector.load %arg4[%c0_63, %c0_64] : memref<16x16xf32, #tpu.memory_space<vmem>>, vector<16x8xf32>
    tpu.vector_store %arg4[%c0_63, %c0_64], %292 {strides = array<i32>} : memref<16x16xf32, #tpu.memory_space<vmem>>, vector<16x8xf32>,
    %cst_65 = arith.constant 57.2957802 : f32
    %294 = vector.broadcast %cst_65 : f32 to vector<16x8xf32>
    %295 = arith.mulf %232, %294 : vector<16x8xf32>
    %c0_66 = arith.constant 0 : index
    %c8 = arith.constant 8 : index
    %296 = vector.load %arg4[%c0_66, %c8] : memref<16x16xf32, #tpu.memory_space<vmem>>, vector<16x8xf32>
    tpu.vector_store %arg4[%c0_66, %c8], %295 {strides = array<i32>} : memref<16x16xf32, #tpu.memory_space<vmem>>, vector<16x8xf32>,
    return
  }
  func.func @transform_0(%arg0: i32) -> (i32, i32) {
    %c0_i32 = arith.constant 0 : i32
    %c0_i32_0 = arith.constant 0 : i32
    %c0_i32_1 = arith.constant 0 : i32
    return %c0_i32, %c0_i32_0 : i32, i32
  }
  func.func @transform_1(%arg0: i32) -> (i32, i32) {
    %c0_i32 = arith.constant 0 : i32
    %c0_i32_0 = arith.constant 0 : i32
    %c0_i32_1 = arith.constant 0 : i32
    return %c0_i32, %c0_i32_0 : i32, i32
  }
  func.func @transform_2(%arg0: i32) -> (i32, i32) {
    %c0_i32 = arith.constant 0 : i32
    %c0_i32_0 = arith.constant 0 : i32
    %c0_i32_1 = arith.constant 0 : i32
    return %c0_i32, %c0_i32_0 : i32, i32
  }
  func.func @transform_3(%arg0: i32) -> (i32, i32) {
    %c0_i32 = arith.constant 0 : i32
    %c0_i32_0 = arith.constant 0 : i32
    %c0_i32_1 = arith.constant 0 : i32
    return %c0_i32, %c0_i32_0 : i32, i32
  }
}

</mosaic_0001>

<llo_original>
// kernel: lata_forward.1
$region0: #{lata_forward.1}
  #allocation0 [shape = 'u32[]', space=smem, size = 0x4, offset = 0x4, fixed_abs, tag = 'smem constant byte address 0x4 - core index']
  #allocation1 [shape = 'u32[144,128]{1,0:T(1,128)}', space=vmem, size = 0x12000, scoped, tag = 'internal scratch']
  %s0 = inlined_call_operand.vmem [shape: f32[16,8], index: 0, kind: input, shape index: {}]
  %s1 = inlined_call_operand.vmem [shape: f32[8,40], index: 1, kind: input, shape index: {}]
  %s2 = inlined_call_operand.vmem [shape: f32[1,56], index: 2, kind: input, shape index: {}]
  %s3 = inlined_call_operand.vmem [shape: f32[16,16], index: 3, kind: output, shape index: {}]
  %s4 = sld [smem:[#allocation0]]
  $region22: #{lata_forward.1} parent=0
    _
  %s6 = ssub.s32 1, %s4
  %s7 = scalar_select 0, %s6, %s4
  // Predicated region
  $region2: #{lata_forward.1} parent=0 // pred_check
    _
  $region3: #{lata_forward.1} parent=0 // pred_check_branch
    %9 = sbr.rel (0) target = $region5
  $region4: #{lata_forward.1} parent=0 // pred_region
    _
  $region5: #{lata_forward.1} parent=0 // pred_fallthru
    _
  // Predicated region
  $region6: #{lata_forward.1} parent=0 // pred_check
    _
  $region7: #{lata_forward.1} parent=0 // pred_check_branch
    %11 = sbr.rel (0) target = $region9
  $region8: #{lata_forward.1} parent=0 // pred_region
    _
  $region9: #{lata_forward.1} parent=0 // pred_fallthru
    _
  // Predicated region
  $region10: #{lata_forward.1} parent=0 // pred_check
    _
  $region11: #{lata_forward.1} parent=0 // pred_check_branch
    %13 = sbr.rel (0) target = $region13
  $region12: #{lata_forward.1} parent=0 // pred_region
    _
  $region13: #{lata_forward.1} parent=0 // pred_fallthru
    _
  %v14 = vld [vmem:[%s0] sm:$0xff]
  %v15 = vld [vmem:[%s0 + $0x8] sm:$0xff]
  %v16 = vld [vmem:[%s1] sm:$0xff]
  %v17 = vld [vmem:[%s2] sm:$0x1]
  %19 = vset.pattern.permute.xlu0 0
  %20 = vperm.xlu0 %19, %v14
  %v21 = vpop.permute.xlu0 %20
  %24 = vset.pattern.permute.xlu0 0
  %25 = vperm.xlu0 %24, %v15
  %v26 = vpop.permute.xlu0 %25
  %v28 = vlaneseq
  %v29 = vshrl.u32 %v28, 7
  %v30 = vsub.s32 0, %v29
  %v31 = vrot.slane %v16, %v30
  %v32 = vmul.f32 %v21, %v31
  %v33 = vmul.f32 %v26, %v31
  %v35 = vlaneseq
  %v36 = vshrl.u32 %v35, 7
  %v37 = vsub.s32 0, %v36
  %v38 = vrot.slane %v17, %v37
  %v40 = vadd.f32 %v38, %v32
  %v41 = vadd.f32 %v38, %v33
  %42 = vset.pattern.permute.xlu0 1
  %43 = vperm.xlu0 %42, %v14
  %v44 = vpop.permute.xlu0 %43
  %46 = vset.pattern.permute.xlu0 1
  %47 = vperm.xlu0 %46, %v15
  %v48 = vpop.permute.xlu0 %47
  %v50 = vlaneseq
  %v51 = vshrl.u32 %v50, 7
  %v52 = vsub.s32 1, %v51
  %v53 = vrot.slane %v16, %v52
  %v54 = vmul.f32 %v44, %v53
  %v55 = vmul.f32 %v48, %v53
  %v56 = vadd.f32 %v40, %v54
  %v57 = vadd.f32 %v41, %v55
  %58 = vset.pattern.permute.xlu0 2
  %59 = vperm.xlu0 %58, %v14
  %v60 = vpop.permute.xlu0 %59
  %62 = vset.pattern.permute.xlu0 2
  %63 = vperm.xlu0 %62, %v15
  %v64 = vpop.permute.xlu0 %63
  %v66 = vlaneseq
  %v67 = vshrl.u32 %v66, 7
  %v68 = vsub.s32 2, %v67
  %v69 = vrot.slane %v16, %v68
  %v70 = vmul.f32 %v60, %v69
  %v71 = vmul.f32 %v64, %v69
  %v72 = vadd.f32 %v56, %v70
  %v73 = vadd.f32 %v57, %v71
  %74 = vset.pattern.permute.xlu0 3
  %75 = vperm.xlu0 %74, %v14
  %v76 = vpop.permute.xlu0 %75
  %78 = vset.pattern.permute.xlu0 3
  %79 = vperm.xlu0 %78, %v15
  %v80 = vpop.permute.xlu0 %79
  %v82 = vlaneseq
  %v83 = vshrl.u32 %v82, 7
  %v84 = vsub.s32 3, %v83
  %v85 = vrot.slane %v16, %v84
  %v86 = vmul.f32 %v76, %v85
  %v87 = vmul.f32 %v80, %v85
  %v88 = vadd.f32 %v72, %v86
  %v89 = vadd.f32 %v73, %v87
  %90 = vset.pattern.permute.xlu0 4
  %91 = vperm.xlu0 %90, %v14
  %v92 = vpop.permute.xlu0 %91
  %94 = vset.pattern.permute.xlu0 4
  %95 = vperm.xlu0 %94, %v15
  %v96 = vpop.permute.xlu0 %95
  %v98 = vlaneseq
  %v99 = vshrl.u32 %v98, 7
  %v100 = vsub.s32 4, %v99
  %v101 = vrot.slane %v16, %v100
  %v102 = vmul.f32 %v92, %v101
  %v103 = vmul.f32 %v96, %v101
  %v104 = vadd.f32 %v88, %v102
  %v105 = vadd.f32 %v89, %v103
  %106 = vset.pattern.permute.xlu0 5
  %107 = vperm.xlu0 %106, %v14
  %v108 = vpop.permute.xlu0 %107
  %110 = vset.pattern.permute.xlu0 5
  %111 = vperm.xlu0 %110, %v15
  %v112 = vpop.permute.xlu0 %111
  %v114 = vlaneseq
  %v115 = vshrl.u32 %v114, 7
  %v116 = vsub.s32 5, %v115
  %v117 = vrot.slane %v16, %v116
  %v118 = vmul.f32 %v108, %v117
  %v119 = vmul.f32 %v112, %v117
  %v120 = vadd.f32 %v104, %v118
  %v121 = vadd.f32 %v105, %v119
  %122 = vset.pattern.permute.xlu0 6
  %123 = vperm.xlu0 %122, %v14
  %v124 = vpop.permute.xlu0 %123
  %126 = vset.pattern.permute.xlu0 6
  %127 = vperm.xlu0 %126, %v15
  %v128 = vpop.permute.xlu0 %127
  %v130 = vlaneseq
  %v131 = vshrl.u32 %v130, 7
  %v132 = vsub.s32 6, %v131
  %v133 = vrot.slane %v16, %v132
  %v134 = vmul.f32 %v124, %v133
  %v135 = vmul.f32 %v128, %v133
  %v136 = vadd.f32 %v120, %v134
  %v137 = vadd.f32 %v121, %v135
  %138 = vset.pattern.permute.xlu0 7
  %139 = vperm.xlu0 %138, %v14
  %v140 = vpop.permute.xlu0 %139
  %142 = vset.pattern.permute.xlu0 7
  %143 = vperm.xlu0 %142, %v15
  %v144 = vpop.permute.xlu0 %143
  %v146 = vlaneseq
  %v147 = vshrl.u32 %v146, 7
  %v148 = vsub.s32 7, %v147
  %v149 = vrot.slane %v16, %v148
  %v150 = vmul.f32 %v140, %v149
  %v151 = vmul.f32 %v144, %v149
  %v152 = vadd.f32 %v136, %v150
  %v153 = vadd.f32 %v137, %v151
  %v154 = vand.u32 2147483647, %v152
  %vm155 = vcmp.le.f32.partialorder %v154, 0.7853982
  %vm156 = vcmp.lt.s32.totalorder %v152, 0
  %v157 = vand.u32 %v152, 2139095040
  %v158 = vshrl.u32 %v157, 23
  %v159 = vsub.s32 %v158, 127
  %v160 = vand.u32 2147483647, %v152
  %v161 = vand.u32 %v160, 8388607
  %v162 = vor.u32 %v161, 8388608
  %v163 = vsub.s32 0, %v162
  %v164 = vadd.s32 %v159, 1
  %vm165 = vcmp.gt.s32.totalorder %v164, 0
  %v166 = vsel %vm165, %v164, 0
  %v167 = vshrl.u32 %v166, 5
  %v168 = vand.u32 %v166, 31
  %v169 = vsub.s32 32, %v168
  %v170 = vshrl.u32 683565275, %v169
  %v171 = vshll.u32 683565275, %v168
  %v172 = vshrl.u32 2475754826, %v169
  %v173 = vor.u32 %v171, %v172
  %v174 = vshll.u32 2475754826, %v168
  %v175 = vshrl.u32 2131351028, %v169
  %v176 = vor.u32 %v174, %v175
  %v177 = vshll.u32 2131351028, %v168
  %v178 = vshrl.u32 2102212464, %v169
  %v179 = vor.u32 %v177, %v178
  %v180 = vshll.u32 2102212464, %v168
  %v181 = vshrl.u32 920167782, %v169
  %v182 = vor.u32 %v180, %v181
  %v183 = vshll.u32 920167782, %v168
  %v184 = vshrl.u32 1326507024, %v169
  %v185 = vor.u32 %v183, %v184
  %vm186 = vcmp.lt.s32.totalorder %v167, 1
  %vm187 = vcmp.lt.s32.totalorder %v167, 2
  %vm188 = vcmp.lt.s32.totalorder %v167, 3
  %vm189 = vcmp.lt.s32.totalorder %v167, 4
  %v190 = vsel %vm186, %v170, %v173
  %v191 = vsel %vm189, %v179, 2102212464
  %v192 = vsel %vm188, %v176, %v191
  %v193 = vsel %vm187, %v190, %v192
  %v194 = vsel %vm186, %v173, %v176
  %v195 = vsel %vm189, %v182, 920167782
  %v196 = vsel %vm188, %v179, %v195
  %v197 = vsel %vm187, %v194, %v196
  %v198 = vsel %vm186, %v176, %v179
  %v199 = vsel %vm189, %v185, 1326507024
  %v200 = vsel %vm188, %v182, %v199
  %v201 = vsel %vm187, %v198, %v200
  %v202 = vshll.u32 %v162, 8
  %v203 = vmul.u32.u64.compose %v202, %v201
  %v204 = vextract.low.u32 %v203
  %v205 = vextract.high.u32 %v203
  %v206 = vmul.u32.u64.compose %v202, %v197
  %v207 = vextract.low.u32 %v206
  %v208 = vextract.high.u32 %v206
  %v209 = vmul.u32 %v202, %v193
  %v210 = vadd.s32 %v205, %v207
  %vm211 = vc.u32 %v205, %v207
  %v212 = vadd.s32 %v208, 1
  %v213 = vsel %vm211, %v212, %v208
  %v214 = vadd.s32 %v209, %v213
  %v215 = vadd.s32 %v214, 536870912
  %v216 = vshrl.u32 %v215, 30
  %v217 = vshll.u32 %v216, 30
  %v218 = vsub.s32 %v214, %v217
  %vm219 = vcmp.lt.s32.totalorder %v218, 0
  %v220 = vsub.s32 0, %v218
  %v221 = vsel %vm219, %v220, %v218
  %v222 = vclz %v221
  %v223 = vsub.s32 %v222, 2
  %vm224 = vcmp.gt.s32.totalorder 0, %v223
  %v225 = vsel %vm224, 0, %v223
  %v226 = vsub.s32 32, %v225
  %v227 = vshll.u32 %v218, %v225
  %v228 = vshrl.u32 %v210, %v226
  %v229 = vor.u32 %v227, %v228
  %v230 = vsub.s32 4294967266, %v225
  %v231 = vadd.s32 %v230, 127
  %v232 = vshll.u32 %v231, 23
  %v233 = vor.u32 4788187, %v232
  %v234 = vand.u32 2147483647, %v233
  %v236 = vcvt.s32.f32 %v229
  %v237 = vmul.f32 %v236, %v234
  %v238 = vxor.u32 %v237, 2147483648
  %v239 = vsel %vm156, %v238, %v237
  %v240 = vsub.s32 4, %v216
  %v241 = vsel %vm156, %v240, %v216
  %v242 = vsel %vm155, %v152, %v239
  %v243 = vsel %vm155, 0, %v241
  %v244 = vcosq.f32.pop %v242
  %v245 = vsinq.f32.pop %v242
  %vm246 = vweird.f32 %v152
  %v247 = vadd.s32 %v243, 3
  %v248 = vand.u32 %v247, 3
  %vm249 = vcmp.lt.s32.totalorder %v248, 2
  %vm250 = vcmp.eq.s32.totalorder %v248, 0
  %v251 = vxor.u32 %v245, 2147483648
  %v252 = vsel %vm250, %v244, %v251
  %vm253 = vcmp.eq.s32.totalorder %v248, 2
  %v254 = vxor.u32 %v244, 2147483648
  %v255 = vsel %vm253, %v254, %v245
  %v256 = vsel %vm249, %v252, %v255
  %v257 = vsel %vm246, nan, %v256
  %v258 = vand.u32 2147483647, %v153
  %vm259 = vcmp.le.f32.partialorder %v258, 0.7853982
  %vm260 = vcmp.lt.s32.totalorder %v153, 0
  %v261 = vand.u32 %v153, 2139095040
  %v262 = vshrl.u32 %v261, 23
  %v263 = vsub.s32 %v262, 127
  %v264 = vand.u32 2147483647, %v153
  %v265 = vand.u32 %v264, 8388607
  %v266 = vor.u32 %v265, 8388608
  %v267 = vsub.s32 0, %v266
  %v268 = vadd.s32 %v263, 1
  %vm269 = vcmp.gt.s32.totalorder %v268, 0
  %v270 = vsel %vm269, %v268, 0
  %v271 = vshrl.u32 %v270, 5
  %v272 = vand.u32 %v270, 31
  %v273 = vsub.s32 32, %v272
  %v274 = vshrl.u32 683565275, %v273
  %v275 = vshll.u32 683565275, %v272
  %v276 = vshrl.u32 2475754826, %v273
  %v277 = vor.u32 %v275, %v276
  %v278 = vshll.u32 2475754826, %v272
  %v279 = vshrl.u32 2131351028, %v273
  %v280 = vor.u32 %v278, %v279
  %v281 = vshll.u32 2131351028, %v272
  %v282 = vshrl.u32 2102212464, %v273
  %v283 = vor.u32 %v281, %v282
  %v284 = vshll.u32 2102212464, %v272
  %v285 = vshrl.u32 920167782, %v273
  %v286 = vor.u32 %v284, %v285
  %v287 = vshll.u32 920167782, %v272
  %v288 = vshrl.u32 1326507024, %v273
  %v289 = vor.u32 %v287, %v288
  %vm290 = vcmp.lt.s32.totalorder %v271, 1
  %vm291 = vcmp.lt.s32.totalorder %v271, 2
  %vm292 = vcmp.lt.s32.totalorder %v271, 3
  %vm293 = vcmp.lt.s32.totalorder %v271, 4
  %v294 = vsel %vm290, %v274, %v277
  %v295 = vsel %vm293, %v283, 2102212464
  %v296 = vsel %vm292, %v280, %v295
  %v297 = vsel %vm291, %v294, %v296
  %v298 = vsel %vm290, %v277, %v280
  %v299 = vsel %vm293, %v286, 920167782
  %v300 = vsel %vm292, %v283, %v299
  %v301 = vsel %vm291, %v298, %v300
  %v302 = vsel %vm290, %v280, %v283
  %v303 = vsel %vm293, %v289, 1326507024
  %v304 = vsel %vm292, %v286, %v303
  %v305 = vsel %vm291, %v302, %v304
  %v306 = vshll.u32 %v266, 8
  %v307 = vmul.u32.u64.compose %v306, %v305
  %v308 = vextract.low.u32 %v307
  %v309 = vextract.high.u32 %v307
  %v310 = vmul.u32.u64.compose %v306, %v301
  %v311 = vextract.low.u32 %v310
  %v312 = vextract.high.u32 %v310
  %v313 = vmul.u32 %v306, %v297
  %v314 = vadd.s32 %v309, %v311
  %vm315 = vc.u32 %v309, %v311
  %v316 = vadd.s32 %v312, 1
  %v317 = vsel %vm315, %v316, %v312
  %v318 = vadd.s32 %v313, %v317
  %v319 = vadd.s32 %v318, 536870912
  %v320 = vshrl.u32 %v319, 30
  %v321 = vshll.u32 %v320, 30
  %v322 = vsub.s32 %v318, %v321
  %vm323 = vcmp.lt.s32.totalorder %v322, 0
  %v324 = vsub.s32 0, %v322
  %v325 = vsel %vm323, %v324, %v322
  %v326 = vclz %v325
  %v327 = vsub.s32 %v326, 2
  %vm328 = vcmp.gt.s32.totalorder 0, %v327
  %v329 = vsel %vm328, 0, %v327
  %v330 = vsub.s32 32, %v329
  %v331 = vshll.u32 %v322, %v329
  %v332 = vshrl.u32 %v314, %v330
  %v333 = vor.u32 %v331, %v332
  %v334 = vsub.s32 4294967266, %v329
  %v335 = vadd.s32 %v334, 127
  %v336 = vshll.u32 %v335, 23
  %v337 = vor.u32 4788187, %v336
  %v338 = vand.u32 2147483647, %v337
  %v340 = vcvt.s32.f32 %v333
  %v341 = vmul.f32 %v340, %v338
  %v342 = vxor.u32 %v341, 2147483648
  %v343 = vsel %vm260, %v342, %v341
  %v344 = vsub.s32 4, %v320
  %v345 = vsel %vm260, %v344, %v320
  %v346 = vsel %vm259, %v153, %v343
  %v347 = vsel %vm259, 0, %v345
  %v348 = vcosq.f32.pop %v346
  %v349 = vsinq.f32.pop %v346
  %vm350 = vweird.f32 %v153
  %v351 = vadd.s32 %v347, 3
  %v352 = vand.u32 %v351, 3
  %vm353 = vcmp.lt.s32.totalorder %v352, 2
  %vm354 = vcmp.eq.s32.totalorder %v352, 0
  %v355 = vxor.u32 %v349, 2147483648
  %v356 = vsel %vm354, %v348, %v355
  %vm357 = vcmp.eq.s32.totalorder %v352, 2
  %v358 = vxor.u32 %v348, 2147483648
  %v359 = vsel %vm357, %v358, %v349
  %v360 = vsel %vm353, %v356, %v359
  %v361 = vsel %vm350, nan, %v360
  %v362 = vand.u32 2147483647, %v152
  %vm363 = vcmp.le.f32.partialorder %v362, 0.7853982
  %vm364 = vcmp.lt.s32.totalorder %v152, 0
  %v365 = vand.u32 %v152, 2139095040
  %v366 = vshrl.u32 %v365, 23
  %v367 = vsub.s32 %v366, 127
  %v368 = vand.u32 2147483647, %v152
  %v369 = vand.u32 %v368, 8388607
  %v370 = vor.u32 %v369, 8388608
  %v371 = vsub.s32 0, %v370
  %v372 = vadd.s32 %v367, 1
  %vm373 = vcmp.gt.s32.totalorder %v372, 0
  %v374 = vsel %vm373, %v372, 0
  %v375 = vshrl.u32 %v374, 5
  %v376 = vand.u32 %v374, 31
  %v377 = vsub.s32 32, %v376
  %v378 = vshrl.u32 683565275, %v377
  %v379 = vshll.u32 683565275, %v376
  %v380 = vshrl.u32 2475754826, %v377
  %v381 = vor.u32 %v379, %v380
  %v382 = vshll.u32 2475754826, %v376
  %v383 = vshrl.u32 2131351028, %v377
  %v384 = vor.u32 %v382, %v383
  %v385 = vshll.u32 2131351028, %v376
  %v386 = vshrl.u32 2102212464, %v377
  %v387 = vor.u32 %v385, %v386
  %v388 = vshll.u32 2102212464, %v376
  %v389 = vshrl.u32 920167782, %v377
  %v390 = vor.u32 %v388, %v389
  %v391 = vshll.u32 920167782, %v376
  %v392 = vshrl.u32 1326507024, %v377
  %v393 = vor.u32 %v391, %v392
  %vm394 = vcmp.lt.s32.totalorder %v375, 1
  %vm395 = vcmp.lt.s32.totalorder %v375, 2
  %vm396 = vcmp.lt.s32.totalorder %v375, 3
  %vm397 = vcmp.lt.s32.totalorder %v375, 4
  %v398 = vsel %vm394, %v378, %v381
  %v399 = vsel %vm397, %v387, 2102212464
  %v400 = vsel %vm396, %v384, %v399
  %v401 = vsel %vm395, %v398, %v400
  %v402 = vsel %vm394, %v381, %v384
  %v403 = vsel %vm397, %v390, 920167782
  %v404 = vsel %vm396, %v387, %v403
  %v405 = vsel %vm395, %v402, %v404
  %v406 = vsel %vm394, %v384, %v387
  %v407 = vsel %vm397, %v393, 1326507024
  %v408 = vsel %vm396, %v390, %v407
  %v409 = vsel %vm395, %v406, %v408
  %v410 = vshll.u32 %v370, 8
  %v411 = vmul.u32.u64.compose %v410, %v409
  %v412 = vextract.low.u32 %v411
  %v413 = vextract.high.u32 %v411
  %v414 = vmul.u32.u64.compose %v410, %v405
  %v415 = vextract.low.u32 %v414
  %v416 = vextract.high.u32 %v414
  %v417 = vmul.u32 %v410, %v401
  %v418 = vadd.s32 %v413, %v415
  %vm419 = vc.u32 %v413, %v415
  %v420 = vadd.s32 %v416, 1
  %v421 = vsel %vm419, %v420, %v416
  %v422 = vadd.s32 %v417, %v421
  %v423 = vadd.s32 %v422, 536870912
  %v424 = vshrl.u32 %v423, 30
  %v425 = vshll.u32 %v424, 30
  %v426 = vsub.s32 %v422, %v425
  %vm427 = vcmp.lt.s32.totalorder %v426, 0
  %v428 = vsub.s32 0, %v426
  %v429 = vsel %vm427, %v428, %v426
  %v430 = vclz %v429
  %v431 = vsub.s32 %v430, 2
  %vm432 = vcmp.gt.s32.totalorder 0, %v431
  %v433 = vsel %vm432, 0, %v431
  %v434 = vsub.s32 32, %v433
  %v435 = vshll.u32 %v426, %v433
  %v436 = vshrl.u32 %v418, %v434
  %v437 = vor.u32 %v435, %v436
  %v438 = vsub.s32 4294967266, %v433
  %v439 = vadd.s32 %v438, 127
  %v440 = vshll.u32 %v439, 23
  %v441 = vor.u32 4788187, %v440
  %v442 = vand.u32 2147483647, %v441
  %v444 = vcvt.s32.f32 %v437
  %v445 = vmul.f32 %v444, %v442
  %v446 = vxor.u32 %v445, 2147483648
  %v447 = vsel %vm364, %v446, %v445
  %v448 = vsub.s32 4, %v424
  %v449 = vsel %vm364, %v448, %v424
  %v450 = vsel %vm363, %v152, %v447
  %v451 = vsel %vm363, 0, %v449
  %v452 = vcosq.f32.pop %v450
  %v453 = vsinq.f32.pop %v450
  %vm454 = vweird.f32 %v152
  %v455 = vand.u32 %v451, 3
  %vm456 = vcmp.lt.s32.totalorder %v455, 2
  %vm457 = vcmp.eq.s32.totalorder %v455, 0
  %v458 = vxor.u32 %v453, 2147483648
  %v459 = vsel %vm457, %v452, %v458
  %vm460 = vcmp.eq.s32.totalorder %v455, 2
  %v461 = vxor.u32 %v452, 2147483648
  %v462 = vsel %vm460, %v461, %v453
  %v463 = vsel %vm456, %v459, %v462
  %v464 = vsel %vm454, nan, %v463
  %v465 = vand.u32 2147483647, %v153
  %vm466 = vcmp.le.f32.partialorder %v465, 0.7853982
  %vm467 = vcmp.lt.s32.totalorder %v153, 0
  %v468 = vand.u32 %v153, 2139095040
  %v469 = vshrl.u32 %v468, 23
  %v470 = vsub.s32 %v469, 127
  %v471 = vand.u32 2147483647, %v153
  %v472 = vand.u32 %v471, 8388607
  %v473 = vor.u32 %v472, 8388608
  %v474 = vsub.s32 0, %v473
  %v475 = vadd.s32 %v470, 1
  %vm476 = vcmp.gt.s32.totalorder %v475, 0
  %v477 = vsel %vm476, %v475, 0
  %v478 = vshrl.u32 %v477, 5
  %v479 = vand.u32 %v477, 31
  %v480 = vsub.s32 32, %v479
  %v481 = vshrl.u32 683565275, %v480
  %v482 = vshll.u32 683565275, %v479
  %v483 = vshrl.u32 2475754826, %v480
  %v484 = vor.u32 %v482, %v483
  %v485 = vshll.u32 2475754826, %v479
  %v486 = vshrl.u32 2131351028, %v480
  %v487 = vor.u32 %v485, %v486
  %v488 = vshll.u32 2131351028, %v479
  %v489 = vshrl.u32 2102212464, %v480
  %v490 = vor.u32 %v488, %v489
  %v491 = vshll.u32 2102212464, %v479
  %v492 = vshrl.u32 920167782, %v480
  %v493 = vor.u32 %v491, %v492
  %v494 = vshll.u32 920167782, %v479
  %v495 = vshrl.u32 1326507024, %v480
  %v496 = vor.u32 %v494, %v495
  %vm497 = vcmp.lt.s32.totalorder %v478, 1
  %vm498 = vcmp.lt.s32.totalorder %v478, 2
  %vm499 = vcmp.lt.s32.totalorder %v478, 3
  %vm500 = vcmp.lt.s32.totalorder %v478, 4
  %v501 = vsel %vm497, %v481, %v484
  %v502 = vsel %vm500, %v490, 2102212464
  %v503 = vsel %vm499, %v487, %v502
  %v504 = vsel %vm498, %v501, %v503
  %v505 = vsel %vm497, %v484, %v487
  %v506 = vsel %vm500, %v493, 920167782
  %v507 = vsel %vm499, %v490, %v506
  %v508 = vsel %vm498, %v505, %v507
  %v509 = vsel %vm497, %v487, %v490
  %v510 = vsel %vm500, %v496, 1326507024
  %v511 = vsel %vm499, %v493, %v510
  %v512 = vsel %vm498, %v509, %v511
  %v513 = vshll.u32 %v473, 8
  %v514 = vmul.u32.u64.compose %v513, %v512
  %v515 = vextract.low.u32 %v514
  %v516 = vextract.high.u32 %v514
  %v517 = vmul.u32.u64.compose %v513, %v508
  %v518 = vextract.low.u32 %v517
  %v519 = vextract.high.u32 %v517
  %v520 = vmul.u32 %v513, %v504
  %v521 = vadd.s32 %v516, %v518
  %vm522 = vc.u32 %v516, %v518
  %v523 = vadd.s32 %v519, 1
  %v524 = vsel %vm522, %v523, %v519
  %v525 = vadd.s32 %v520, %v524
  %v526 = vadd.s32 %v525, 536870912
  %v527 = vshrl.u32 %v526, 30
  %v528 = vshll.u32 %v527, 30
  %v529 = vsub.s32 %v525, %v528
  %vm530 = vcmp.lt.s32.totalorder %v529, 0
  %v531 = vsub.s32 0, %v529
  %v532 = vsel %vm530, %v531, %v529
  %v533 = vclz %v532
  %v534 = vsub.s32 %v533, 2
  %vm535 = vcmp.gt.s32.totalorder 0, %v534
  %v536 = vsel %vm535, 0, %v534
  %v537 = vsub.s32 32, %v536
  %v538 = vshll.u32 %v529, %v536
  %v539 = vshrl.u32 %v521, %v537
  %v540 = vor.u32 %v538, %v539
  %v541 = vsub.s32 4294967266, %v536
  %v542 = vadd.s32 %v541, 127
  %v543 = vshll.u32 %v542, 23
  %v544 = vor.u32 4788187, %v543
  %v545 = vand.u32 2147483647, %v544
  %v547 = vcvt.s32.f32 %v540
  %v548 = vmul.f32 %v547, %v545
  %v549 = vxor.u32 %v548, 2147483648
  %v550 = vsel %vm467, %v549, %v548
  %v551 = vsub.s32 4, %v527
  %v552 = vsel %vm467, %v551, %v527
  %v553 = vsel %vm466, %v153, %v550
  %v554 = vsel %vm466, 0, %v552
  %v555 = vcosq.f32.pop %v553
  %v556 = vsinq.f32.pop %v553
  %vm557 = vweird.f32 %v153
  %v558 = vand.u32 %v554, 3
  %vm559 = vcmp.lt.s32.totalorder %v558, 2
  %vm560 = vcmp.eq.s32.totalorder %v558, 0
  %v561 = vxor.u32 %v556, 2147483648
  %v562 = vsel %vm560, %v555, %v561
  %vm563 = vcmp.eq.s32.totalorder %v558, 2
  %v564 = vxor.u32 %v555, 2147483648
  %v565 = vsel %vm563, %v564, %v556
  %v566 = vsel %vm559, %v562, %v565
  %v567 = vsel %vm557, nan, %v566
  %570 = vrot.lane.b32.xlu0 %v257, 120
  %v571 = vpop.permute.xlu0 %570
  %572 = vrot.lane.b32.xlu0 %v361, 120
  %v573 = vpop.permute.xlu0 %572
  %v576 = vmul.f32 %v257, %v571
  %v577 = vmul.f32 %v361, %v573
  %580 = vrot.lane.b32.xlu0 %v152, 112
  %v581 = vpop.permute.xlu0 %580
  %582 = vrot.lane.b32.xlu0 %v153, 112
  %v583 = vpop.permute.xlu0 %582
  %v586 = vmul.f32 %v576, %v581
  %v587 = vmul.f32 %v577, %v583
  %590 = vrot.lane.b32.xlu0 %v464, 120
  %v591 = vpop.permute.xlu0 %590
  %592 = vrot.lane.b32.xlu0 %v567, 120
  %v593 = vpop.permute.xlu0 %592
  %v596 = vmul.f32 %v257, %v591
  %v597 = vmul.f32 %v361, %v593
  %v598 = vmul.f32 %v596, %v581
  %v599 = vmul.f32 %v597, %v583
  %v600 = vmul.f32 %v464, %v581
  %v601 = vmul.f32 %v567, %v583
  %603 = vset.pattern.permute.xlu0 0
  %604 = vperm.xlu0 %603, %v600
  %v605 = vpop.permute.xlu0 %604
  %608 = vset.pattern.permute.xlu0 0
  %609 = vperm.xlu0 %608, %v601
  %v610 = vpop.permute.xlu0 %609
  %v612 = vmul.f32 %v605, %v31
  %v613 = vmul.f32 %v610, %v31
  %v614 = vadd.f32 %v38, %v612
  %v615 = vadd.f32 %v38, %v613
  %616 = vset.pattern.permute.xlu0 1
  %617 = vperm.xlu0 %616, %v600
  %v618 = vpop.permute.xlu0 %617
  %620 = vset.pattern.permute.xlu0 1
  %621 = vperm.xlu0 %620, %v601
  %v622 = vpop.permute.xlu0 %621
  %v624 = vmul.f32 %v618, %v53
  %v625 = vmul.f32 %v622, %v53
  %v626 = vadd.f32 %v614, %v624
  %v627 = vadd.f32 %v615, %v625
  %628 = vset.pattern.permute.xlu0 2
  %629 = vperm.xlu0 %628, %v600
  %v630 = vpop.permute.xlu0 %629
  %632 = vset.pattern.permute.xlu0 2
  %633 = vperm.xlu0 %632, %v601
  %v634 = vpop.permute.xlu0 %633
  %v636 = vmul.f32 %v630, %v69
  %v637 = vmul.f32 %v634, %v69
  %v638 = vadd.f32 %v626, %v636
  %v639 = vadd.f32 %v627, %v637
  %640 = vset.pattern.permute.xlu0 3
  %641 = vperm.xlu0 %640, %v600
  %v642 = vpop.permute.xlu0 %641
  %644 = vset.pattern.permute.xlu0 3
  %645 = vperm.xlu0 %644, %v601
  %v646 = vpop.permute.xlu0 %645
  %v648 = vmul.f32 %v642, %v85
  %v649 = vmul.f32 %v646, %v85
  %v650 = vadd.f32 %v638, %v648
  %v651 = vadd.f32 %v639, %v649
  %652 = vset.pattern.permute.xlu0 4
  %653 = vperm.xlu0 %652, %v600
  %v654 = vpop.permute.xlu0 %653
  %656 = vset.pattern.permute.xlu0 4
  %657 = vperm.xlu0 %656, %v601
  %v658 = vpop.permute.xlu0 %657
  %v660 = vmul.f32 %v654, %v101
  %v661 = vmul.f32 %v658, %v101
  %v662 = vadd.f32 %v650, %v660
  %v663 = vadd.f32 %v651, %v661
  %664 = vset.pattern.permute.xlu0 5
  %665 = vperm.xlu0 %664, %v600
  %v666 = vpop.permute.xlu0 %665
  %668 = vset.pattern.permute.xlu0 5
  %669 = vperm.xlu0 %668, %v601
  %v670 = vpop.permute.xlu0 %669
  %v672 = vmul.f32 %v666, %v117
  %v673 = vmul.f32 %v670, %v117
  %v674 = vadd.f32 %v662, %v672
  %v675 = vadd.f32 %v663, %v673
  %676 = vset.pattern.permute.xlu0 6
  %677 = vperm.xlu0 %676, %v600
  %v678 = vpop.permute.xlu0 %677
  %680 = vset.pattern.permute.xlu0 6
  %681 = vperm.xlu0 %680, %v601
  %v682 = vpop.permute.xlu0 %681
  %v684 = vmul.f32 %v678, %v133
  %v685 = vmul.f32 %v682, %v133
  %v686 = vadd.f32 %v674, %v684
  %v687 = vadd.f32 %v675, %v685
  %688 = vset.pattern.permute.xlu0 7
  %689 = vperm.xlu0 %688, %v600
  %v690 = vpop.permute.xlu0 %689
  %692 = vset.pattern.permute.xlu0 7
  %693 = vperm.xlu0 %692, %v601
  %v694 = vpop.permute.xlu0 %693
  %v696 = vmul.f32 %v690, %v149
  %v697 = vmul.f32 %v694, %v149
  %v698 = vadd.f32 %v686, %v696
  %v699 = vadd.f32 %v687, %v697
  %700 = vrot.lane.b32.xlu0 %v464, 16
  %v701 = vpop.permute.xlu0 %700
  %702 = vrot.lane.b32.xlu0 %v567, 16
  %v703 = vpop.permute.xlu0 %702
  %v706 = vmul.f32 %v38, %v701
  %v707 = vmul.f32 %v38, %v703
  %710 = vrot.lane.b32.xlu0 %v586, 40
  %v711 = vpop.permute.xlu0 %710
  %712 = vrot.lane.b32.xlu0 %v587, 40
  %v713 = vpop.permute.xlu0 %712
  %v716 = vadd.f32 %v706, %v711
  %v717 = vadd.f32 %v707, %v713
  %718 = vrot.lane.b32.xlu0 %v257, 16
  %v719 = vpop.permute.xlu0 %718
  %720 = vrot.lane.b32.xlu0 %v361, 16
  %v721 = vpop.permute.xlu0 %720
  %v724 = vmul.f32 %v38, %v719
  %v725 = vmul.f32 %v38, %v721
  %728 = vrot.lane.b32.xlu0 %v598, 40
  %v729 = vpop.permute.xlu0 %728
  %730 = vrot.lane.b32.xlu0 %v599, 40
  %v731 = vpop.permute.xlu0 %730
  %v734 = vadd.f32 %v724, %v729
  %v735 = vadd.f32 %v725, %v731
  %738 = vrot.lane.b32.xlu0 %v698, 16
  %v739 = vpop.permute.xlu0 %738
  %740 = vrot.lane.b32.xlu0 %v699, 16
  %v741 = vpop.permute.xlu0 %740
  %v744 = vadd.f32 %v38, %v739
  %v745 = vadd.f32 %v38, %v741
  %v746 = vsub.f32 %v716, 2697.228
  %v747 = vsub.f32 %v717, 2697.228
  %v748 = vsub.f32 %v734, -9406.354
  %v749 = vsub.f32 %v735, -9406.354
  %v750 = vsub.f32 %v744, 2688.1873
  %v751 = vsub.f32 %v745, 2688.1873
  %v752 = vmul.f32 %v746, %v746
  %v753 = vmul.f32 %v747, %v747
  %v754 = vmul.f32 %v748, %v748
  %v755 = vmul.f32 %v749, %v749
  %v756 = vadd.f32 %v752, %v754
  %v757 = vadd.f32 %v753, %v755
  %v758 = vrsqrt.pop %v756
  %v759 = vmul.f32 %v756, %v758
  %vm760 = vcmp.eq.f32.partialorder %v756, inf
  %v761 = vsel %vm760, %v756, %v759
  %vm762 = vcmp.eq.f32.partialorder %v756, 0.0
  %v763 = vand.u32 %v756, 2147483648
  %v764 = vsel %vm762, %v763, %v761
  %v765 = vrsqrt.pop %v757
  %v766 = vmul.f32 %v757, %v765
  %vm767 = vcmp.eq.f32.partialorder %v757, inf
  %v768 = vsel %vm767, %v757, %v766
  %vm769 = vcmp.eq.f32.partialorder %v757, 0.0
  %v770 = vand.u32 %v757, 2147483648
  %v771 = vsel %vm769, %v770, %v768
  %v772 = vmul.f32 %v750, 6378137.0
  %v773 = vmul.f32 %v751, 6378137.0
  %v774 = vmul.f32 %v764, 6356800.0
  %v775 = vmul.f32 %v771, 6356800.0
  %v776 = vrcp.pop %v774
  %v777 = vrcp.pop %v775
  %780 = vrot.lane.b32.xlu0 %v776, 8
  %v781 = vpop.permute.xlu0 %780
  %782 = vrot.lane.b32.xlu0 %v777, 8
  %v783 = vpop.permute.xlu0 %782
  %v786 = vmul.f32 %v772, %v781
  %v787 = vmul.f32 %v773, %v783
  %vm788 = vcmp.lt.f32.partialorder %v786, 0.0
  %vm789 = vcmp.lt.f32.partialorder %v787, 0.0
  %v790 = vsel %vm788, -1.0, 1.0
  %v791 = vsel %vm789, -1.0, 1.0
  %v792 = vand.u32 2147483647, %v786
  %v793 = vand.u32 2147483647, %v787
  %vm794 = vcmp.gt.f32.partialorder %v792, 2.4142137
  %vm795 = vcmp.gt.f32.partialorder %v793, 2.4142137
  %vm796 = vcmp.gt.f32.partialorder %v792, 0.41421357
  %vm797 = vcmp.gt.f32.partialorder %v793, 0.41421357
  %vm798 = vmxor %vm794, 1
  %vm799 = vmxor %vm795, 1
  %vm800 = vmand %vm796, %vm798
  %vm801 = vmand %vm797, %vm799
  %v802 = vsub.f32 %v792, 1.0
  %v803 = vsub.f32 %v793, 1.0
  %v804 = vsel %vm800, %v802, %v792
  %v805 = vsel %vm801, %v803, %v793
  %v806 = vsel %vm794, -1.0, %v804
  %v807 = vsel %vm795, -1.0, %v805
  %v808 = vadd.f32 %v792, 1.0
  %v809 = vadd.f32 %v793, 1.0
  %v810 = vsel %vm800, %v808, 1.0
  %v811 = vsel %vm801, %v809, 1.0
  %v812 = vsel %vm794, %v792, %v810
  %v813 = vsel %vm795, %v793, %v811
  %v814 = vrcp.pop %v812
  %v815 = vmul.f32 %v806, %v814
  %v816 = vrcp.pop %v813
  %v817 = vmul.f32 %v807, %v816
  %v818 = vsel %vm800, 0.7853982, 0.0
  %v819 = vsel %vm801, 0.7853982, 0.0
  %v820 = vsel %vm794, 1.5707964, %v818
  %v821 = vsel %vm795, 1.5707964, %v819
  %v822 = vmul.f32 %v815, %v815
  %v823 = vmul.f32 %v817, %v817
  %v824 = vmul.f32 %v822, 0.080537446
  %v825 = vmul.f32 %v823, 0.080537446
  %v826 = vsub.f32 %v824, 0.13877685
  %v827 = vsub.f32 %v825, 0.13877685
  %v828 = vmul.f32 %v826, %v822
  %v829 = vmul.f32 %v827, %v823
  %v830 = vadd.f32 %v828, 0.19977711
  %v831 = vadd.f32 %v829, 0.19977711
  %v832 = vmul.f32 %v830, %v822
  %v833 = vmul.f32 %v831, %v823
  %v834 = vsub.f32 %v832, 0.3333295
  %v835 = vsub.f32 %v833, 0.3333295
  %v836 = vmul.f32 %v834, %v822
  %v837 = vmul.f32 %v835, %v823
  %v838 = vmul.f32 %v836, %v815
  %v839 = vmul.f32 %v837, %v817
  %v840 = vadd.f32 %v838, %v815
  %v841 = vadd.f32 %v839, %v817
  %v842 = vadd.f32 %v820, %v840
  %v843 = vadd.f32 %v821, %v841
  %v844 = vmul.f32 %v790, %v842
  %v845 = vmul.f32 %v791, %v843
  %v846 = vrcp.pop %v746
  %v847 = vrcp.pop %v747
  %v848 = vmul.f32 %v748, %v846
  %v849 = vmul.f32 %v749, %v847
  %vm850 = vcmp.lt.f32.partialorder %v848, 0.0
  %vm851 = vcmp.lt.f32.partialorder %v849, 0.0
  %v852 = vsel %vm850, -1.0, 1.0
  %v853 = vsel %vm851, -1.0, 1.0
  %v854 = vand.u32 2147483647, %v848
  %v855 = vand.u32 2147483647, %v849
  %vm856 = vcmp.gt.f32.partialorder %v854, 2.4142137
  %vm857 = vcmp.gt.f32.partialorder %v855, 2.4142137
  %vm858 = vcmp.gt.f32.partialorder %v854, 0.41421357
  %vm859 = vcmp.gt.f32.partialorder %v855, 0.41421357
  %vm860 = vmxor %vm856, 1
  %vm861 = vmxor %vm857, 1
  %vm862 = vmand %vm858, %vm860
  %vm863 = vmand %vm859, %vm861
  %v864 = vsub.f32 %v854, 1.0
  %v865 = vsub.f32 %v855, 1.0
  %v866 = vsel %vm862, %v864, %v854
  %v867 = vsel %vm863, %v865, %v855
  %v868 = vsel %vm856, -1.0, %v866
  %v869 = vsel %vm857, -1.0, %v867
  %v870 = vadd.f32 %v854, 1.0
  %v871 = vadd.f32 %v855, 1.0
  %v872 = vsel %vm862, %v870, 1.0
  %v873 = vsel %vm863, %v871, 1.0
  %v874 = vsel %vm856, %v854, %v872
  %v875 = vsel %vm857, %v855, %v873
  %v876 = vrcp.pop %v874
  %v877 = vmul.f32 %v868, %v876
  %v878 = vrcp.pop %v875
  %v879 = vmul.f32 %v869, %v878
  %v880 = vsel %vm862, 0.7853982, 0.0
  %v881 = vsel %vm863, 0.7853982, 0.0
  %v882 = vsel %vm856, 1.5707964, %v880
  %v883 = vsel %vm857, 1.5707964, %v881
  %v884 = vmul.f32 %v877, %v877
  %v885 = vmul.f32 %v879, %v879
  %v886 = vmul.f32 %v884, 0.080537446
  %v887 = vmul.f32 %v885, 0.080537446
  %v888 = vsub.f32 %v886, 0.13877685
  %v889 = vsub.f32 %v887, 0.13877685
  %v890 = vmul.f32 %v888, %v884
  %v891 = vmul.f32 %v889, %v885
  %v892 = vadd.f32 %v890, 0.19977711
  %v893 = vadd.f32 %v891, 0.19977711
  %v894 = vmul.f32 %v892, %v884
  %v895 = vmul.f32 %v893, %v885
  %v896 = vsub.f32 %v894, 0.3333295
  %v897 = vsub.f32 %v895, 0.3333295
  %v898 = vmul.f32 %v896, %v884
  %v899 = vmul.f32 %v897, %v885
  %v900 = vmul.f32 %v898, %v877
  %v901 = vmul.f32 %v899, %v879
  %v902 = vadd.f32 %v900, %v877
  %v903 = vadd.f32 %v901, %v879
  %v904 = vadd.f32 %v882, %v902
  %v905 = vadd.f32 %v883, %v903
  %v906 = vmul.f32 %v852, %v904
  %v907 = vmul.f32 %v853, %v905
  %v908 = vand.u32 2147483647, %v844
  %vm909 = vcmp.le.f32.partialorder %v908, 0.7853982
  %vm910 = vcmp.lt.s32.totalorder %v844, 0
  %v911 = vand.u32 %v844, 2139095040
  %v912 = vshrl.u32 %v911, 23
  %v913 = vsub.s32 %v912, 127
  %v914 = vand.u32 2147483647, %v844
  %v915 = vand.u32 %v914, 8388607
  %v916 = vor.u32 %v915, 8388608
  %v917 = vsub.s32 0, %v916
  %v918 = vadd.s32 %v913, 1
  %vm919 = vcmp.gt.s32.totalorder %v918, 0
  %v920 = vsel %vm919, %v918, 0
  %v921 = vshrl.u32 %v920, 5
  %v922 = vand.u32 %v920, 31
  %v923 = vsub.s32 32, %v922
  %v924 = vshrl.u32 683565275, %v923
  %v925 = vshll.u32 683565275, %v922
  %v926 = vshrl.u32 2475754826, %v923
  %v927 = vor.u32 %v925, %v926
  %v928 = vshll.u32 2475754826, %v922
  %v929 = vshrl.u32 2131351028, %v923
  %v930 = vor.u32 %v928, %v929
  %v931 = vshll.u32 2131351028, %v922
  %v932 = vshrl.u32 2102212464, %v923
  %v933 = vor.u32 %v931, %v932
  %v934 = vshll.u32 2102212464, %v922
  %v935 = vshrl.u32 920167782, %v923
  %v936 = vor.u32 %v934, %v935
  %v937 = vshll.u32 920167782, %v922
  %v938 = vshrl.u32 1326507024, %v923
  %v939 = vor.u32 %v937, %v938
  %vm940 = vcmp.lt.s32.totalorder %v921, 1
  %vm941 = vcmp.lt.s32.totalorder %v921, 2
  %vm942 = vcmp.lt.s32.totalorder %v921, 3
  %vm943 = vcmp.lt.s32.totalorder %v921, 4
  %v944 = vsel %vm940, %v924, %v927
  %v945 = vsel %vm943, %v933, 2102212464
  %v946 = vsel %vm942, %v930, %v945
  %v947 = vsel %vm941, %v944, %v946
  %v948 = vsel %vm940, %v927, %v930
  %v949 = vsel %vm943, %v936, 920167782
  %v950 = vsel %vm942, %v933, %v949
  %v951 = vsel %vm941, %v948, %v950
  %v952 = vsel %vm940, %v930, %v933
  %v953 = vsel %vm943, %v939, 1326507024
  %v954 = vsel %vm942, %v936, %v953
  %v955 = vsel %vm941, %v952, %v954
  %v956 = vshll.u32 %v916, 8
  %v957 = vmul.u32.u64.compose %v956, %v955
  %v958 = vextract.low.u32 %v957
  %v959 = vextract.high.u32 %v957
  %v960 = vmul.u32.u64.compose %v956, %v951
  %v961 = vextract.low.u32 %v960
  %v962 = vextract.high.u32 %v960
  %v963 = vmul.u32 %v956, %v947
  %v964 = vadd.s32 %v959, %v961
  %vm965 = vc.u32 %v959, %v961
  %v966 = vadd.s32 %v962, 1
  %v967 = vsel %vm965, %v966, %v962
  %v968 = vadd.s32 %v963, %v967
  %v969 = vadd.s32 %v968, 536870912
  %v970 = vshrl.u32 %v969, 30
  %v971 = vshll.u32 %v970, 30
  %v972 = vsub.s32 %v968, %v971
  %vm973 = vcmp.lt.s32.totalorder %v972, 0
  %v974 = vsub.s32 0, %v972
  %v975 = vsel %vm973, %v974, %v972
  %v976 = vclz %v975
  %v977 = vsub.s32 %v976, 2
  %vm978 = vcmp.gt.s32.totalorder 0, %v977
  %v979 = vsel %vm978, 0, %v977
  %v980 = vsub.s32 32, %v979
  %v981 = vshll.u32 %v972, %v979
  %v982 = vshrl.u32 %v964, %v980
  %v983 = vor.u32 %v981, %v982
  %v984 = vsub.s32 4294967266, %v979
  %v985 = vadd.s32 %v984, 127
  %v986 = vshll.u32 %v985, 23
  %v987 = vor.u32 4788187, %v986
  %v988 = vand.u32 2147483647, %v987
  %v990 = vcvt.s32.f32 %v983
  %v991 = vmul.f32 %v990, %v988
  %v992 = vxor.u32 %v991, 2147483648
  %v993 = vsel %vm910, %v992, %v991
  %v994 = vsub.s32 4, %v970
  %v995 = vsel %vm910, %v994, %v970
  %v996 = vsel %vm909, %v844, %v993
  %v997 = vsel %vm909, 0, %v995
  %v998 = vcosq.f32.pop %v996
  %v999 = vsinq.f32.pop %v996
  %vm1000 = vweird.f32 %v844
  %v1001 = vadd.s32 %v997, 3
  %v1002 = vand.u32 %v1001, 3
  %vm1003 = vcmp.lt.s32.totalorder %v1002, 2
  %vm1004 = vcmp.eq.s32.totalorder %v1002, 0
  %v1005 = vxor.u32 %v999, 2147483648
  %v1006 = vsel %vm1004, %v998, %v1005
  %vm1007 = vcmp.eq.s32.totalorder %v1002, 2
  %v1008 = vxor.u32 %v998, 2147483648
  %v1009 = vsel %vm1007, %v1008, %v999
  %v1010 = vsel %vm1003, %v1006, %v1009
  %v1011 = vsel %vm1000, nan, %v1010
  %v1012 = vand.u32 2147483647, %v845
  %vm1013 = vcmp.le.f32.partialorder %v1012, 0.7853982
  %vm1014 = vcmp.lt.s32.totalorder %v845, 0
  %v1015 = vand.u32 %v845, 2139095040
  %v1016 = vshrl.u32 %v1015, 23
  %v1017 = vsub.s32 %v1016, 127
  %v1018 = vand.u32 2147483647, %v845
  %v1019 = vand.u32 %v1018, 8388607
  %v1020 = vor.u32 %v1019, 8388608
  %v1021 = vsub.s32 0, %v1020
  %v1022 = vadd.s32 %v1017, 1
  %vm1023 = vcmp.gt.s32.totalorder %v1022, 0
  %v1024 = vsel %vm1023, %v1022, 0
  %v1025 = vshrl.u32 %v1024, 5
  %v1026 = vand.u32 %v1024, 31
  %v1027 = vsub.s32 32, %v1026
  %v1028 = vshrl.u32 683565275, %v1027
  %v1029 = vshll.u32 683565275, %v1026
  %v1030 = vshrl.u32 2475754826, %v1027
  %v1031 = vor.u32 %v1029, %v1030
  %v1032 = vshll.u32 2475754826, %v1026
  %v1033 = vshrl.u32 2131351028, %v1027
  %v1034 = vor.u32 %v1032, %v1033
  %v1035 = vshll.u32 2131351028, %v1026
  %v1036 = vshrl.u32 2102212464, %v1027
  %v1037 = vor.u32 %v1035, %v1036
  %v1038 = vshll.u32 2102212464, %v1026
  %v1039 = vshrl.u32 920167782, %v1027
  %v1040 = vor.u32 %v1038, %v1039
  %v1041 = vshll.u32 920167782, %v1026
  %v1042 = vshrl.u32 1326507024, %v1027
  %v1043 = vor.u32 %v1041, %v1042
  %vm1044 = vcmp.lt.s32.totalorder %v1025, 1
  %vm1045 = vcmp.lt.s32.totalorder %v1025, 2
  %vm1046 = vcmp.lt.s32.totalorder %v1025, 3
  %vm1047 = vcmp.lt.s32.totalorder %v1025, 4
  %v1048 = vsel %vm1044, %v1028, %v1031
  %v1049 = vsel %vm1047, %v1037, 2102212464
  %v1050 = vsel %vm1046, %v1034, %v1049
  %v1051 = vsel %vm1045, %v1048, %v1050
  %v1052 = vsel %vm1044, %v1031, %v1034
  %v1053 = vsel %vm1047, %v1040, 920167782
  %v1054 = vsel %vm1046, %v1037, %v1053
  %v1055 = vsel %vm1045, %v1052, %v1054
  %v1056 = vsel %vm1044, %v1034, %v1037
  %v1057 = vsel %vm1047, %v1043, 1326507024
  %v1058 = vsel %vm1046, %v1040, %v1057
  %v1059 = vsel %vm1045, %v1056, %v1058
  %v1060 = vshll.u32 %v1020, 8
  %v1061 = vmul.u32.u64.compose %v1060, %v1059
  %v1062 = vextract.low.u32 %v1061
  %v1063 = vextract.high.u32 %v1061
  %v1064 = vmul.u32.u64.compose %v1060, %v1055
  %v1065 = vextract.low.u32 %v1064
  %v1066 = vextract.high.u32 %v1064
  %v1067 = vmul.u32 %v1060, %v1051
  %v1068 = vadd.s32 %v1063, %v1065
  %vm1069 = vc.u32 %v1063, %v1065
  %v1070 = vadd.s32 %v1066, 1
  %v1071 = vsel %vm1069, %v1070, %v1066
  %v1072 = vadd.s32 %v1067, %v1071
  %v1073 = vadd.s32 %v1072, 536870912
  %v1074 = vshrl.u32 %v1073, 30
  %v1075 = vshll.u32 %v1074, 30
  %v1076 = vsub.s32 %v1072, %v1075
  %vm1077 = vcmp.lt.s32.totalorder %v1076, 0
  %v1078 = vsub.s32 0, %v1076
  %v1079 = vsel %vm1077, %v1078, %v1076
  %v1080 = vclz %v1079
  %v1081 = vsub.s32 %v1080, 2
  %vm1082 = vcmp.gt.s32.totalorder 0, %v1081
  %v1083 = vsel %vm1082, 0, %v1081
  %v1084 = vsub.s32 32, %v1083
  %v1085 = vshll.u32 %v1076, %v1083
  %v1086 = vshrl.u32 %v1068, %v1084
  %v1087 = vor.u32 %v1085, %v1086
  %v1088 = vsub.s32 4294967266, %v1083
  %v1089 = vadd.s32 %v1088, 127
  %v1090 = vshll.u32 %v1089, 23
  %v1091 = vor.u32 4788187, %v1090
  %v1092 = vand.u32 2147483647, %v1091
  %v1094 = vcvt.s32.f32 %v1087
  %v1095 = vmul.f32 %v1094, %v1092
  %v1096 = vxor.u32 %v1095, 2147483648
  %v1097 = vsel %vm1014, %v1096, %v1095
  %v1098 = vsub.s32 4, %v1074
  %v1099 = vsel %vm1014, %v1098, %v1074
  %v1100 = vsel %vm1013, %v845, %v1097
  %v1101 = vsel %vm1013, 0, %v1099
  %v1102 = vcosq.f32.pop %v1100
  %v1103 = vsinq.f32.pop %v1100
  %vm1104 = vweird.f32 %v845
  %v1105 = vadd.s32 %v1101, 3
  %v1106 = vand.u32 %v1105, 3
  %vm1107 = vcmp.lt.s32.totalorder %v1106, 2
  %vm1108 = vcmp.eq.s32.totalorder %v1106, 0
  %v1109 = vxor.u32 %v1103, 2147483648
  %v1110 = vsel %vm1108, %v1102, %v1109
  %vm1111 = vcmp.eq.s32.totalorder %v1106, 2
  %v1112 = vxor.u32 %v1102, 2147483648
  %v1113 = vsel %vm1111, %v1112, %v1103
  %v1114 = vsel %vm1107, %v1110, %v1113
  %v1115 = vsel %vm1104, nan, %v1114
  %v1116 = vand.u32 2147483647, %v844
  %vm1117 = vcmp.le.f32.partialorder %v1116, 0.7853982
  %vm1118 = vcmp.lt.s32.totalorder %v844, 0
  %v1119 = vand.u32 %v844, 2139095040
  %v1120 = vshrl.u32 %v1119, 23
  %v1121 = vsub.s32 %v1120, 127
  %v1122 = vand.u32 2147483647, %v844
  %v1123 = vand.u32 %v1122, 8388607
  %v1124 = vor.u32 %v1123, 8388608
  %v1125 = vsub.s32 0, %v1124
  %v1126 = vadd.s32 %v1121, 1
  %vm1127 = vcmp.gt.s32.totalorder %v1126, 0
  %v1128 = vsel %vm1127, %v1126, 0
  %v1129 = vshrl.u32 %v1128, 5
  %v1130 = vand.u32 %v1128, 31
  %v1131 = vsub.s32 32, %v1130
  %v1132 = vshrl.u32 683565275, %v1131
  %v1133 = vshll.u32 683565275, %v1130
  %v1134 = vshrl.u32 2475754826, %v1131
  %v1135 = vor.u32 %v1133, %v1134
  %v1136 = vshll.u32 2475754826, %v1130
  %v1137 = vshrl.u32 2131351028, %v1131
  %v1138 = vor.u32 %v1136, %v1137
  %v1139 = vshll.u32 2131351028, %v1130
  %v1140 = vshrl.u32 2102212464, %v1131
  %v1141 = vor.u32 %v1139, %v1140
  %v1142 = vshll.u32 2102212464, %v1130
  %v1143 = vshrl.u32 920167782, %v1131
  %v1144 = vor.u32 %v1142, %v1143
  %v1145 = vshll.u32 920167782, %v1130
  %v1146 = vshrl.u32 1326507024, %v1131
  %v1147 = vor.u32 %v1145, %v1146
  %vm1148 = vcmp.lt.s32.totalorder %v1129, 1
  %vm1149 = vcmp.lt.s32.totalorder %v1129, 2
  %vm1150 = vcmp.lt.s32.totalorder %v1129, 3
  %vm1151 = vcmp.lt.s32.totalorder %v1129, 4
  %v1152 = vsel %vm1148, %v1132, %v1135
  %v1153 = vsel %vm1151, %v1141, 2102212464
  %v1154 = vsel %vm1150, %v1138, %v1153
  %v1155 = vsel %vm1149, %v1152, %v1154
  %v1156 = vsel %vm1148, %v1135, %v1138
  %v1157 = vsel %vm1151, %v1144, 920167782
  %v1158 = vsel %vm1150, %v1141, %v1157
  %v1159 = vsel %vm1149, %v1156, %v1158
  %v1160 = vsel %vm1148, %v1138, %v1141
  %v1161 = vsel %vm1151, %v1147, 1326507024
  %v1162 = vsel %vm1150, %v1144, %v1161
  %v1163 = vsel %vm1149, %v1160, %v1162
  %v1164 = vshll.u32 %v1124, 8
  %v1165 = vmul.u32.u64.compose %v1164, %v1163
  %v1166 = vextract.low.u32 %v1165
  %v1167 = vextract.high.u32 %v1165
  %v1168 = vmul.u32.u64.compose %v1164, %v1159
  %v1169 = vextract.low.u32 %v1168
  %v1170 = vextract.high.u32 %v1168
  %v1171 = vmul.u32 %v1164, %v1155
  %v1172 = vadd.s32 %v1167, %v1169
  %vm1173 = vc.u32 %v1167, %v1169
  %v1174 = vadd.s32 %v1170, 1
  %v1175 = vsel %vm1173, %v1174, %v1170
  %v1176 = vadd.s32 %v1171, %v1175
  %v1177 = vadd.s32 %v1176, 536870912
  %v1178 = vshrl.u32 %v1177, 30
  %v1179 = vshll.u32 %v1178, 30
  %v1180 = vsub.s32 %v1176, %v1179
  %vm1181 = vcmp.lt.s32.totalorder %v1180, 0
  %v1182 = vsub.s32 0, %v1180
  %v1183 = vsel %vm1181, %v1182, %v1180
  %v1184 = vclz %v1183
  %v1185 = vsub.s32 %v1184, 2
  %vm1186 = vcmp.gt.s32.totalorder 0, %v1185
  %v1187 = vsel %vm1186, 0, %v1185
  %v1188 = vsub.s32 32, %v1187
  %v1189 = vshll.u32 %v1180, %v1187
  %v1190 = vshrl.u32 %v1172, %v1188
  %v1191 = vor.u32 %v1189, %v1190
  %v1192 = vsub.s32 4294967266, %v1187
  %v1193 = vadd.s32 %v1192, 127
  %v1194 = vshll.u32 %v1193, 23
  %v1195 = vor.u32 4788187, %v1194
  %v1196 = vand.u32 2147483647, %v1195
  %v1198 = vcvt.s32.f32 %v1191
  %v1199 = vmul.f32 %v1198, %v1196
  %v1200 = vxor.u32 %v1199, 2147483648
  %v1201 = vsel %vm1118, %v1200, %v1199
  %v1202 = vsub.s32 4, %v1178
  %v1203 = vsel %vm1118, %v1202, %v1178
  %v1204 = vsel %vm1117, %v844, %v1201
  %v1205 = vsel %vm1117, 0, %v1203
  %v1206 = vcosq.f32.pop %v1204
  %v1207 = vsinq.f32.pop %v1204
  %vm1208 = vweird.f32 %v844
  %v1209 = vand.u32 %v1205, 3
  %vm1210 = vcmp.lt.s32.totalorder %v1209, 2
  %vm1211 = vcmp.eq.s32.totalorder %v1209, 0
  %v1212 = vxor.u32 %v1207, 2147483648
  %v1213 = vsel %vm1211, %v1206, %v1212
  %vm1214 = vcmp.eq.s32.totalorder %v1209, 2
  %v1215 = vxor.u32 %v1206, 2147483648
  %v1216 = vsel %vm1214, %v1215, %v1207
  %v1217 = vsel %vm1210, %v1213, %v1216
  %v1218 = vsel %vm1208, nan, %v1217
  %v1219 = vand.u32 2147483647, %v845
  %vm1220 = vcmp.le.f32.partialorder %v1219, 0.7853982
  %vm1221 = vcmp.lt.s32.totalorder %v845, 0
  %v1222 = vand.u32 %v845, 2139095040
  %v1223 = vshrl.u32 %v1222, 23
  %v1224 = vsub.s32 %v1223, 127
  %v1225 = vand.u32 2147483647, %v845
  %v1226 = vand.u32 %v1225, 8388607
  %v1227 = vor.u32 %v1226, 8388608
  %v1228 = vsub.s32 0, %v1227
  %v1229 = vadd.s32 %v1224, 1
  %vm1230 = vcmp.gt.s32.totalorder %v1229, 0
  %v1231 = vsel %vm1230, %v1229, 0
  %v1232 = vshrl.u32 %v1231, 5
  %v1233 = vand.u32 %v1231, 31
  %v1234 = vsub.s32 32, %v1233
  %v1235 = vshrl.u32 683565275, %v1234
  %v1236 = vshll.u32 683565275, %v1233
  %v1237 = vshrl.u32 2475754826, %v1234
  %v1238 = vor.u32 %v1236, %v1237
  %v1239 = vshll.u32 2475754826, %v1233
  %v1240 = vshrl.u32 2131351028, %v1234
  %v1241 = vor.u32 %v1239, %v1240
  %v1242 = vshll.u32 2131351028, %v1233
  %v1243 = vshrl.u32 2102212464, %v1234
  %v1244 = vor.u32 %v1242, %v1243
  %v1245 = vshll.u32 2102212464, %v1233
  %v1246 = vshrl.u32 920167782, %v1234
  %v1247 = vor.u32 %v1245, %v1246
  %v1248 = vshll.u32 920167782, %v1233
  %v1249 = vshrl.u32 1326507024, %v1234
  %v1250 = vor.u32 %v1248, %v1249
  %vm1251 = vcmp.lt.s32.totalorder %v1232, 1
  %vm1252 = vcmp.lt.s32.totalorder %v1232, 2
  %vm1253 = vcmp.lt.s32.totalorder %v1232, 3
  %vm1254 = vcmp.lt.s32.totalorder %v1232, 4
  %v1255 = vsel %vm1251, %v1235, %v1238
  %v1256 = vsel %vm1254, %v1244, 2102212464
  %v1257 = vsel %vm1253, %v1241, %v1256
  %v1258 = vsel %vm1252, %v1255, %v1257
  %v1259 = vsel %vm1251, %v1238, %v1241
  %v1260 = vsel %vm1254, %v1247, 920167782
  %v1261 = vsel %vm1253, %v1244, %v1260
  %v1262 = vsel %vm1252, %v1259, %v1261
  %v1263 = vsel %vm1251, %v1241, %v1244
  %v1264 = vsel %vm1254, %v1250, 1326507024
  %v1265 = vsel %vm1253, %v1247, %v1264
  %v1266 = vsel %vm1252, %v1263, %v1265
  %v1267 = vshll.u32 %v1227, 8
  %v1268 = vmul.u32.u64.compose %v1267, %v1266
  %v1269 = vextract.low.u32 %v1268
  %v1270 = vextract.high.u32 %v1268
  %v1271 = vmul.u32.u64.compose %v1267, %v1262
  %v1272 = vextract.low.u32 %v1271
  %v1273 = vextract.high.u32 %v1271
  %v1274 = vmul.u32 %v1267, %v1258
  %v1275 = vadd.s32 %v1270, %v1272
  %vm1276 = vc.u32 %v1270, %v1272
  %v1277 = vadd.s32 %v1273, 1
  %v1278 = vsel %vm1276, %v1277, %v1273
  %v1279 = vadd.s32 %v1274, %v1278
  %v1280 = vadd.s32 %v1279, 536870912
  %v1281 = vshrl.u32 %v1280, 30
  %v1282 = vshll.u32 %v1281, 30
  %v1283 = vsub.s32 %v1279, %v1282
  %vm1284 = vcmp.lt.s32.totalorder %v1283, 0
  %v1285 = vsub.s32 0, %v1283
  %v1286 = vsel %vm1284, %v1285, %v1283
  %v1287 = vclz %v1286
  %v1288 = vsub.s32 %v1287, 2
  %vm1289 = vcmp.gt.s32.totalorder 0, %v1288
  %v1290 = vsel %vm1289, 0, %v1288
  %v1291 = vsub.s32 32, %v1290
  %v1292 = vshll.u32 %v1283, %v1290
  %v1293 = vshrl.u32 %v1275, %v1291
  %v1294 = vor.u32 %v1292, %v1293
  %v1295 = vsub.s32 4294967266, %v1290
  %v1296 = vadd.s32 %v1295, 127
  %v1297 = vshll.u32 %v1296, 23
  %v1298 = vor.u32 4788187, %v1297
  %v1299 = vand.u32 2147483647, %v1298
  %v1301 = vcvt.s32.f32 %v1294
  %v1302 = vmul.f32 %v1301, %v1299
  %v1303 = vxor.u32 %v1302, 2147483648
  %v1304 = vsel %vm1221, %v1303, %v1302
  %v1305 = vsub.s32 4, %v1281
  %v1306 = vsel %vm1221, %v1305, %v1281
  %v1307 = vsel %vm1220, %v845, %v1304
  %v1308 = vsel %vm1220, 0, %v1306
  %v1309 = vcosq.f32.pop %v1307
  %v1310 = vsinq.f32.pop %v1307
  %vm1311 = vweird.f32 %v845
  %v1312 = vand.u32 %v1308, 3
  %vm1313 = vcmp.lt.s32.totalorder %v1312, 2
  %vm1314 = vcmp.eq.s32.totalorder %v1312, 0
  %v1315 = vxor.u32 %v1310, 2147483648
  %v1316 = vsel %vm1314, %v1309, %v1315
  %vm1317 = vcmp.eq.s32.totalorder %v1312, 2
  %v1318 = vxor.u32 %v1309, 2147483648
  %v1319 = vsel %vm1317, %v1318, %v1310
  %v1320 = vsel %vm1313, %v1316, %v1319
  %v1321 = vsel %vm1311, nan, %v1320
  %v1322 = vmul.f32 %v1011, 42745.617
  %v1323 = vmul.f32 %v1115, 42745.617
  %v1324 = vmul.f32 %v1322, %v1011
  %v1325 = vmul.f32 %v1323, %v1115
  %v1326 = vmul.f32 %v1324, %v1011
  %v1327 = vmul.f32 %v1325, %v1115
  %v1328 = vadd.f32 %v750, %v1326
  %v1329 = vadd.f32 %v751, %v1327
  %v1330 = vmul.f32 %v1218, 42602.625
  %v1331 = vmul.f32 %v1321, 42602.625
  %v1332 = vmul.f32 %v1330, %v1218
  %v1333 = vmul.f32 %v1331, %v1321
  %v1334 = vmul.f32 %v1332, %v1218
  %v1335 = vmul.f32 %v1333, %v1321
  %1338 = vrot.lane.b32.xlu0 %v1334, 120
  %v1339 = vpop.permute.xlu0 %1338
  %1340 = vrot.lane.b32.xlu0 %v1335, 120
  %v1341 = vpop.permute.xlu0 %1340
  %v1344 = vsub.f32 %v764, %v1339
  %v1345 = vsub.f32 %v771, %v1341
  %v1346 = vrcp.pop %v1344
  %v1347 = vrcp.pop %v1345
  %1350 = vrot.lane.b32.xlu0 %v1346, 8
  %v1351 = vpop.permute.xlu0 %1350
  %1352 = vrot.lane.b32.xlu0 %v1347, 8
  %v1353 = vpop.permute.xlu0 %1352
  %v1356 = vmul.f32 %v1328, %v1351
  %v1357 = vmul.f32 %v1329, %v1353
  %vm1358 = vcmp.lt.f32.partialorder %v1356, 0.0
  %vm1359 = vcmp.lt.f32.partialorder %v1357, 0.0
  %v1360 = vsel %vm1358, -1.0, 1.0
  %v1361 = vsel %vm1359, -1.0, 1.0
  %v1362 = vand.u32 2147483647, %v1356
  %v1363 = vand.u32 2147483647, %v1357
  %vm1364 = vcmp.gt.f32.partialorder %v1362, 2.4142137
  %vm1365 = vcmp.gt.f32.partialorder %v1363, 2.4142137
  %vm1366 = vcmp.gt.f32.partialorder %v1362, 0.41421357
  %vm1367 = vcmp.gt.f32.partialorder %v1363, 0.41421357
  %vm1368 = vmxor %vm1364, 1
  %vm1369 = vmxor %vm1365, 1
  %vm1370 = vmand %vm1366, %vm1368
  %vm1371 = vmand %vm1367, %vm1369
  %v1372 = vsub.f32 %v1362, 1.0
  %v1373 = vsub.f32 %v1363, 1.0
  %v1374 = vsel %vm1370, %v1372, %v1362
  %v1375 = vsel %vm1371, %v1373, %v1363
  %v1376 = vsel %vm1364, -1.0, %v1374
  %v1377 = vsel %vm1365, -1.0, %v1375
  %v1378 = vadd.f32 %v1362, 1.0
  %v1379 = vadd.f32 %v1363, 1.0
  %v1380 = vsel %vm1370, %v1378, 1.0
  %v1381 = vsel %vm1371, %v1379, 1.0
  %v1382 = vsel %vm1364, %v1362, %v1380
  %v1383 = vsel %vm1365, %v1363, %v1381
  %v1384 = vrcp.pop %v1382
  %v1385 = vmul.f32 %v1376, %v1384
  %v1386 = vrcp.pop %v1383
  %v1387 = vmul.f32 %v1377, %v1386
  %v1388 = vsel %vm1370, 0.7853982, 0.0
  %v1389 = vsel %vm1371, 0.7853982, 0.0
  %v1390 = vsel %vm1364, 1.5707964, %v1388
  %v1391 = vsel %vm1365, 1.5707964, %v1389
  %v1392 = vmul.f32 %v1385, %v1385
  %v1393 = vmul.f32 %v1387, %v1387
  %v1394 = vmul.f32 %v1392, 0.080537446
  %v1395 = vmul.f32 %v1393, 0.080537446
  %v1396 = vsub.f32 %v1394, 0.13877685
  %v1397 = vsub.f32 %v1395, 0.13877685
  %v1398 = vmul.f32 %v1396, %v1392
  %v1399 = vmul.f32 %v1397, %v1393
  %v1400 = vadd.f32 %v1398, 0.19977711
  %v1401 = vadd.f32 %v1399, 0.19977711
  %v1402 = vmul.f32 %v1400, %v1392
  %v1403 = vmul.f32 %v1401, %v1393
  %v1404 = vsub.f32 %v1402, 0.3333295
  %v1405 = vsub.f32 %v1403, 0.3333295
  %v1406 = vmul.f32 %v1404, %v1392
  %v1407 = vmul.f32 %v1405, %v1393
  %v1408 = vmul.f32 %v1406, %v1385
  %v1409 = vmul.f32 %v1407, %v1387
  %v1410 = vadd.f32 %v1408, %v1385
  %v1411 = vadd.f32 %v1409, %v1387
  %v1412 = vadd.f32 %v1390, %v1410
  %v1413 = vadd.f32 %v1391, %v1411
  %v1414 = vmul.f32 %v1360, %v1412
  %v1415 = vmul.f32 %v1361, %v1413
  %v1416 = vmul.f32 %v1414, 57.29578
  %v1417 = vmul.f32 %v1415, 57.29578
  %1420 = vrot.lane.b32.xlu0 %v1416, 80
  %v1421 = vpop.permute.xlu0 %1420
  %1422 = vrot.lane.b32.xlu0 %v1417, 80
  %v1423 = vpop.permute.xlu0 %1422
  %vm1426 = vcmask 64512
  %1427 = vst.msk [vmem:[%s3] sm:$0xff] %vm1426, %v1421
  %1428 = vst.msk [vmem:[%s3 + $0x8] sm:$0xff] %vm1426, %v1423
  %v1429 = vmul.f32 %v906, 57.29578
  %v1430 = vmul.f32 %v907, 57.29578
  %1433 = vrot.lane.b32.xlu0 %v1429, 96
  %v1434 = vpop.permute.xlu0 %1433
  %1435 = vrot.lane.b32.xlu0 %v1430, 96
  %v1436 = vpop.permute.xlu0 %1435
  %vm1439 = vcmask 130112
  %1440 = vst.msk [vmem:[%s3] sm:$0xff] %vm1439, %v1434
  %1441 = vst.msk [vmem:[%s3 + $0x8] sm:$0xff] %vm1439, %v1436
  // Predicated region
  $region14: #{lata_forward.1} parent=0 // pred_check
    _
  $region15: #{lata_forward.1} parent=0 // pred_check_branch
    %1443 = sbr.rel (0) target = $region17
  $region16: #{lata_forward.1} parent=0 // pred_region
    _
  $region17: #{lata_forward.1} parent=0 // pred_fallthru
    _
  // Predicated region
  $region18: #{lata_forward.1} parent=0 // pred_check
    _
  $region19: #{lata_forward.1} parent=0 // pred_check_branch
    %1445 = sbr.rel (0) target = $region21
  $region20: #{lata_forward.1} parent=0 // pred_region
    _
  $region21: #{lata_forward.1} parent=0 // pred_fallthru
    _

</llo_original>
